<compile_context>
chip_gen: v5e
topology: v5e:2x2
jax: 0.10.0
libtpu: 0.0.40
codegen_flags: <defaults>
</compile_context>

<pallas_src>
from functools import partial

import numpy as np
import jax
import jax.numpy as jnp
from jax.experimental import pallas as pl
from jax.experimental.pallas import tpu as pltpu

_EPS = 1e-5
_SCALES = (1, 2, 3, 6)
_S3_TOTAL = sum(s ** 3 for s in _SCALES)            # 252


def _round_up(v, m):
    return (v + m - 1) // m * m


# ----------------------------------------------------------------------------
# Pallas kernel: the entire PyramidPooling forward, fused.
# ----------------------------------------------------------------------------
def _pyramid_kernel(x_ref,        # (N*C, DHWp)            compute_dtype
                    p_ref,        # (DHWp, S3p)             concatenated pooling operator
                    u_ref,        # (S3p, DHWp)             concatenated upsample operator
                    wall_ref,     # (4*inter, C)            stacked branch conv weights
                    wfall_ref,    # (C_out, 4*inter)        final-conv slices for branches
                    wx_ref,       # (C_out, C)              final-conv slice, identity path
                    mask_ref,     # (4*inter, S3p) f32      1/(N*s^3) inside scale block i
                    o_ref,        # (N, C_out, DHWp) f32    output
                    stack_ref,    # (S3p + Cp, DHWp)        scratch: [U_cat ; x_n ; 0]
                    w2_ref,       # (C_out, S3p + Cp)       scratch: [g_n | wx | 0]
                    *, n_batch, n_ch, s3p, dhw_true):
    f32 = jnp.float32
    mxu = x_ref.dtype
    C = n_ch

    # ---- phase 1: batched pooling matmul + stacked branch convs + per-scale BN/ReLU ----
    # One lane-dense matmul covers all four adaptive-avg-pools for the whole batch.
    pooled = jnp.dot(x_ref[...], p_ref[...], preferred_element_type=f32)      # (N*C, S3p)

    mask_w = mask_ref[...]                  # weighted block-diagonal mask
    bmask = (mask_w > 0.0).astype(f32)      # binary validity mask

    z_all, zsum, zsq = [], 0.0, 0.0
    for n in range(n_batch):
        pooled_n = pooled[n * C:(n + 1) * C, :]
        # Row block i of z is branch-i's 1x1x1 conv applied to the pooled activations;
        # only the columns of scale i's slice are meaningful (mask_w selects them for the
        # statistics, bmask zeroes the rest before the reassociated final conv).
        z = jnp.dot(wall_ref[...], pooled_n.astype(mxu), preferred_element_type=f32)
        z_all.append(z)
        zsum = zsum + jnp.sum(z * mask_w, axis=1, keepdims=True)   # -> per-channel mean
        zsq = zsq + jnp.sum(z * z * mask_w, axis=1, keepdims=True)  # -> per-channel E[z^2]
    mean = zsum
    var = jnp.maximum(zsq - mean * mean, 0.0)      # guard E[z^2]-mean^2 cancellation
    inv = jax.lax.rsqrt(var + _EPS)

    # Reassociated final conv at pooled resolution: g_n = WF_all @ relu(bn(z_n)).
    g = []
    for n in range(n_batch):
        zr = jnp.maximum((z_all[n] - mean) * inv, 0.0) * bmask
        g.append(jnp.dot(wfall_ref[...], zr.astype(mxu),
                         preferred_element_type=f32))              # (C_out, S3p)

    # ---- phase 2: one fused heavy matmul per batch, pre-BN result streamed to o_ref ----
    #   stack = [U_cat ; x_n ; 0]   (S3p + Cp, DHWp)   (U_cat and zero pad written once)
    #   w2_n  = [g_n   | wx  | 0]   (C_out,   S3p + Cp)
    #   w2_n @ stack = g_n @ U_cat + wx @ x_n  == all four upsampled branches + identity.
    stack_ref[...] = jnp.zeros_like(stack_ref)
    stack_ref[pl.ds(0, s3p), :] = u_ref[...]
    w2_ref[...] = jnp.zeros_like(w2_ref)
    w2_ref[:, pl.ds(s3p, C)] = wx_ref[...]

    osum, osq = 0.0, 0.0
    for n in range(n_batch):
        stack_ref[pl.ds(s3p, C), :] = x_ref[pl.ds(n * C, C), :]
        w2_ref[:, pl.ds(0, s3p)] = g[n].astype(mxu)
        acc = jnp.dot(w2_ref[...], stack_ref[...],
                      preferred_element_type=f32)                   # (C_out, DHWp)
        o_ref[n] = acc                          # stream pre-BN output; no live N-sized set
        osum = osum + jnp.sum(acc, axis=1, keepdims=True)
        osq = osq + jnp.sum(acc * acc, axis=1, keepdims=True)

    # ---- phase 3: final BatchNorm3d (train stats) + ReLU, in place over o_ref ----------
    # Padded lanes of acc are exactly zero, so all-lane sums over the TRUE count are exact.
    cnt = float(n_batch * dhw_true)
    mean = osum / cnt
    var = jnp.maximum(osq / cnt - mean * mean, 0.0)
    inv = jax.lax.rsqrt(var + _EPS)
    for n in range(n_batch):
        o_ref[n] = jnp.maximum((o_ref[n] - mean) * inv, 0.0)


# ----------------------------------------------------------------------------
# Host-side operator construction (runs at trace time under jit -> baked constants).
# ----------------------------------------------------------------------------
def _pool_mat_1d(L, s):
    """AdaptiveAvgPool1d matrix, shape (s, L)."""
    A = np.zeros((s, L), dtype=np.float32)
    for i in range(s):
        a = (i * L) // s
        b = -((-(i + 1) * L) // s)   # ceil
        A[i, a:b] = 1.0 / (b - a)
    return A


def _upsample_mat_1d(L, s):
    """Linear interpolation (align_corners=True) matrix from length s to L, shape (L, s)."""
    M = np.zeros((L, s), dtype=np.float32)
    if s == 1:
        M[:, 0] = 1.0
        return M
    scale = (s - 1) / (L - 1)
    for o in range(L):
        src = o * scale
        i0 = min(int(np.floor(src)), s - 1)
        i1 = min(i0 + 1, s - 1)
        f = src - i0
        M[o, i0] += 1.0 - f
        M[o, i1] += f
    return M


def _build_cat_operators(D, H, W, dhw_pad, s3_pad):
    """Concatenated pooling (DHWp, S3p) and trilinear upsample (S3p, DHWp) operators."""
    DHW = D * H * W
    P = np.zeros((dhw_pad, s3_pad), np.float32)
    U = np.zeros((s3_pad, dhw_pad), np.float32)
    off = 0
    for s in _SCALES:
        Ad, Ah, Aw = _pool_mat_1d(D, s), _pool_mat_1d(H, s), _pool_mat_1d(W, s)
        P3 = np.kron(np.kron(Ad, Ah), Aw)                 # (s^3, DHW)
        P[:DHW, off:off + s ** 3] = P3.T
        Md, Mh, Mw = _upsample_mat_1d(D, s), _upsample_mat_1d(H, s), _upsample_mat_1d(W, s)
        U3 = np.kron(np.kron(Md, Mh), Mw)                 # (DHW, s^3)
        U[off:off + s ** 3, :DHW] = U3.T
        off += s ** 3
    return P, U


def _build_mask(inter, n_batch, s3_pad):
    """Block-diagonal weighted mask: 1/(N*s^3) in scale block i, zero elsewhere."""
    m = np.zeros((4 * inter, s3_pad), np.float32)
    off = 0
    for i, s in enumerate(_SCALES):
        m[i * inter:(i + 1) * inter, off:off + s ** 3] = 1.0 / float(n_batch * s ** 3)
        off += s ** 3
    return m


@partial(jax.jit, static_argnames=("compute_dtype",))
def pyramid_pooling_forward(x, branch_weights, out_weight, *, compute_dtype=jnp.bfloat16):
    N, C, D, H, W = x.shape
    C_out = out_weight.shape[0]
    assert C % 4 == 0 and out_weight.shape[1] == 2 * C
    inter = C // 4
    DHW = D * H * W
    DHWp = _round_up(DHW, 128)                 # lane-dense spatial axis
    S3p = _round_up(_S3_TOTAL, 128)            # 256: concatenated pooled axis
    Cp = _round_up(C, 16)                      # aligned identity block inside the stack

    # (N*C, DHWp): batch folded into M for the pooling matmul; padded lanes are zero.
    x2 = jnp.pad(x.reshape(N * C, DHW), ((0, 0), (0, DHWp - DHW))).astype(compute_dtype)

    P_np, U_np = _build_cat_operators(D, H, W, DHWp, S3p)
    p_cat = jnp.asarray(P_np, compute_dtype)
    u_cat = jnp.asarray(U_np, compute_dtype)

    # All MXU operands in compute_dtype (f32 accumulation inside the kernel).
    w_all = jnp.concatenate([w.astype(compute_dtype) for w in branch_weights], axis=0)
    wf_all = out_weight[:, C:].astype(compute_dtype)      # (C_out, 4*inter)
    wx = out_weight[:, :C].astype(compute_dtype)          # (C_out, C)
    mask_w = jnp.asarray(_build_mask(inter, N, S3p), jnp.float32)

    args = (x2, p_cat, u_cat, w_all, wf_all, wx, mask_w)

    # Exact resident VMEM (inputs + output + scratch) plus fixed headroom, capped well
    # below the physical per-core VMEM (64 MiB on v7x, 128 MiB on v5e/v6e).
    itemsize = x2.dtype.itemsize
    scratch_bytes = (S3p + Cp) * DHWp * itemsize + C_out * (S3p + Cp) * itemsize
    resident = sum(int(np.prod(a.shape)) * a.dtype.itemsize for a in args)
    resident += N * C_out * DHWp * 4 + scratch_bytes
    try:
        phys_vmem = int(getattr(pltpu.get_tpu_info(), "vmem_capacity_bytes",
                                64 * 1024 * 1024))
    except Exception:
        phys_vmem = 64 * 1024 * 1024
    vmem_limit = int(min(max(resident + (16 << 20), 32 << 20), int(0.85 * phys_vmem)))

    kernel = partial(_pyramid_kernel, n_batch=N, n_ch=C, s3p=S3p, dhw_true=DHW)
    out3 = pl.pallas_call(
        kernel,
        out_shape=jax.ShapeDtypeStruct((N, C_out, DHWp), jnp.float32),
        in_specs=[pl.BlockSpec(memory_space=pltpu.MemorySpace.VMEM)] * len(args),
        out_specs=pl.BlockSpec(memory_space=pltpu.MemorySpace.VMEM),
        scratch_shapes=[pltpu.VMEM((S3p + Cp, DHWp), compute_dtype),
                        pltpu.VMEM((C_out, S3p + Cp), compute_dtype)],
        compiler_params=pltpu.CompilerParams(vmem_limit_bytes=vmem_limit),
    )(*args)

    return out3[:, :, :DHW].reshape(N, C_out, D, H, W)


# ----------------------------------------------------------------------------
# Pure-JAX reference (independent formulation) for a correctness check.
# ----------------------------------------------------------------------------
def _reference(x, branch_weights, out_weight):
    N, C, D, H, W = x.shape

    def bn_relu(z):
        mean = z.mean(axis=(0, 2, 3, 4), keepdims=True)
        var = ((z - mean) ** 2).mean(axis=(0, 2, 3, 4), keepdims=True)
        return jax.nn.relu((z - mean) / jnp.sqrt(var + _EPS))

    feats = [x]
    for s, Wb in zip(_SCALES, branch_weights):
        p = x.reshape(N, C, s, D // s, s, H // s, s, W // s).mean(axis=(3, 5, 7))
        z = bn_relu(jnp.einsum('oc,ncijk->noijk', Wb, p))
        Md = jnp.asarray(_upsample_mat_1d(D, s))
        Mh = jnp.asarray(_upsample_mat_1d(H, s))
        Mw = jnp.asarray(_upsample_mat_1d(W, s))
        feats.append(jnp.einsum('noijk,di,hj,wk->nodhw', z, Md, Mh, Mw))
    cat = jnp.concatenate(feats, axis=1)
    return bn_relu(jnp.einsum('oc,ncdhw->nodhw', out_weight, cat))


if __name__ == "__main__":
    N, C, C_out = 2, 8, 8            # in_channels divisible by 4 (inter = 2)
    D = H = W = 6                    # divisible by all pyramid sizes (reference pooling needs it)
    inter = C // 4

    key = jax.random.PRNGKey(0)
    kx, k1, k2, k3, k4, ko = jax.random.split(key, 6)
    x = jax.random.normal(kx, (N, C, D, H, W), jnp.float32)

    # kaiming_normal_-style deterministic init for the 1x1x1 conv weights (fan_in mode)
    branch_weights = tuple(
        jax.random.normal(k, (inter, C), jnp.float32) * np.sqrt(2.0 / C)
        for k in (k1, k2, k3, k4))
    out_weight = jax.random.normal(ko, (C_out, 2 * C), jnp.float32) * np.sqrt(2.0 / (2 * C))

    ref = jax.block_until_ready(_reference(x, branch_weights, out_weight))

    # f32 run: tight check of the restructured algebra (concatenated operators, mask-based
    # per-scale BN stats, fused [g|wx]@[U;x] matmul, streamed two-pass final BN).
    out_f32 = jax.block_until_ready(
        pyramid_pooling_forward(x, branch_weights, out_weight, compute_dtype=jnp.float32))
    assert out_f32.shape == (N, C_out, D, H, W), out_f32.shape
    err_f32 = float(jnp.max(jnp.abs(out_f32 - ref)))
    assert err_f32 < 2e-2, f"f32 kernel mismatch vs reference: max abs err {err_f32}"

    # bf16-MXU run (f32 accumulation, f32 BN math): looser tolerance for low-precision operands.
    out_bf16 = jax.block_until_ready(
        pyramid_pooling_forward(x, branch_weights, out_weight, compute_dtype=jnp.bfloat16))
    err_bf16 = float(jnp.max(jnp.abs(out_bf16 - ref)))
    assert err_bf16 < 1e-1, f"bf16 kernel mismatch vs reference: max abs err {err_bf16}"

    print("KERNEL_OK")
</pallas_src>

<mosaic_0001>
module attributes {stable_mosaic.version = 11 : i64} {
  func.func @_pyramid_kernel(%arg0: memref<16x256xf32, #tpu.memory_space<vmem>>, %arg1: memref<256x256xf32, #tpu.memory_space<vmem>>, %arg2: memref<256x256xf32, #tpu.memory_space<vmem>>, %arg3: memref<8x8xf32, #tpu.memory_space<vmem>>, %arg4: memref<8x8xf32, #tpu.memory_space<vmem>>, %arg5: memref<8x8xf32, #tpu.memory_space<vmem>>, %arg6: memref<8x256xf32, #tpu.memory_space<vmem>>, %arg7: memref<2x8x256xf32, #tpu.memory_space<vmem>>, %arg8: memref<272x256xf32, #tpu.memory_space<vmem>>, %arg9: memref<8x272xf32, #tpu.memory_space<vmem>>) attributes {dimension_semantics = [], scalar_prefetch = 0 : i64, scratch_operands = 2 : i64, tpu.core_type = #tpu.core_type<tc>} {
    %c0 = arith.constant 0 : index
    %c0_0 = arith.constant 0 : index
    %0 = vector.load %arg0[%c0, %c0_0] : memref<16x256xf32, #tpu.memory_space<vmem>>, vector<16x256xf32>
    %c0_1 = arith.constant 0 : index
    %c0_2 = arith.constant 0 : index
    %1 = vector.load %arg1[%c0_1, %c0_2] : memref<256x256xf32, #tpu.memory_space<vmem>>, vector<256x256xf32>
    %cst = arith.constant dense<0.000000e+00> : vector<16x256xf32>
    %2 = tpu.matmul %0, %1, %cst {dimension_numbers = #tpu.dot_dimension_numbers<[1], [0], [0], [1], [0, 0, 1, 1], [], []>} : vector<16x256xf32>, vector<256x256xf32>, vector<16x256xf32> -> vector<16x256xf32>
    %c0_3 = arith.constant 0 : index
    %c0_4 = arith.constant 0 : index
    %3 = vector.load %arg6[%c0_3, %c0_4] : memref<8x256xf32, #tpu.memory_space<vmem>>, vector<8x256xf32>
    %cst_5 = arith.constant 0.000000e+00 : f32
    %4 = vector.broadcast %cst_5 : f32 to vector<8x256xf32>
    %5 = arith.cmpf ogt, %3, %4 : vector<8x256xf32>
    %6 = arith.extui %5 : vector<8x256xi1> to vector<8x256xi32>
    %7 = arith.sitofp %6 : vector<8x256xi32> to vector<8x256xf32>
    %8 = vector.extract_strided_slice %2 {offsets = [0, 0], sizes = [8, 256], strides = [1, 1]} : vector<16x256xf32> to vector<8x256xf32>
    %c0_6 = arith.constant 0 : index
    %c0_7 = arith.constant 0 : index
    %9 = vector.load %arg3[%c0_6, %c0_7] : memref<8x8xf32, #tpu.memory_space<vmem>>, vector<8x8xf32>
    %cst_8 = arith.constant dense<0.000000e+00> : vector<8x256xf32>
    %10 = tpu.matmul %9, %8, %cst_8 {dimension_numbers = #tpu.dot_dimension_numbers<[1], [0], [0], [1], [0, 0, 1, 1], [], []>} : vector<8x8xf32>, vector<8x256xf32>, vector<8x256xf32> -> vector<8x256xf32>
    %11 = arith.mulf %10, %3 : vector<8x256xf32>
    %cst_9 = arith.constant dense<0.000000e+00> : vector<8xf32>
    %12 = vector.multi_reduction <add>, %11, %cst_9 [1] : vector<8x256xf32> to vector<8xf32>
    %13 = vector.shape_cast %12 : vector<8xf32> to vector<8x1xf32>
    %cst_10 = arith.constant 0.000000e+00 : f32
    %14 = vector.broadcast %cst_10 : f32 to vector<8x1xf32>
    %15 = arith.addf %14, %13 : vector<8x1xf32>
    %16 = arith.mulf %10, %10 : vector<8x256xf32>
    %17 = arith.mulf %16, %3 : vector<8x256xf32>
    %cst_11 = arith.constant dense<0.000000e+00> : vector<8xf32>
    %18 = vector.multi_reduction <add>, %17, %cst_11 [1] : vector<8x256xf32> to vector<8xf32>
    %19 = vector.shape_cast %18 : vector<8xf32> to vector<8x1xf32>
    %cst_12 = arith.constant 0.000000e+00 : f32
    %20 = vector.broadcast %cst_12 : f32 to vector<8x1xf32>
    %21 = arith.addf %20, %19 : vector<8x1xf32>
    %22 = vector.extract_strided_slice %2 {offsets = [8, 0], sizes = [8, 256], strides = [1, 1]} : vector<16x256xf32> to vector<8x256xf32>
    %c0_13 = arith.constant 0 : index
    %c0_14 = arith.constant 0 : index
    %23 = vector.load %arg3[%c0_13, %c0_14] : memref<8x8xf32, #tpu.memory_space<vmem>>, vector<8x8xf32>
    %cst_15 = arith.constant dense<0.000000e+00> : vector<8x256xf32>
    %24 = tpu.matmul %23, %22, %cst_15 {dimension_numbers = #tpu.dot_dimension_numbers<[1], [0], [0], [1], [0, 0, 1, 1], [], []>} : vector<8x8xf32>, vector<8x256xf32>, vector<8x256xf32> -> vector<8x256xf32>
    %25 = arith.mulf %24, %3 : vector<8x256xf32>
    %cst_16 = arith.constant dense<0.000000e+00> : vector<8xf32>
    %26 = vector.multi_reduction <add>, %25, %cst_16 [1] : vector<8x256xf32> to vector<8xf32>
    %27 = vector.shape_cast %26 : vector<8xf32> to vector<8x1xf32>
    %28 = arith.addf %15, %27 : vector<8x1xf32>
    %29 = arith.mulf %24, %24 : vector<8x256xf32>
    %30 = arith.mulf %29, %3 : vector<8x256xf32>
    %cst_17 = arith.constant dense<0.000000e+00> : vector<8xf32>
    %31 = vector.multi_reduction <add>, %30, %cst_17 [1] : vector<8x256xf32> to vector<8xf32>
    %32 = vector.shape_cast %31 : vector<8xf32> to vector<8x1xf32>
    %33 = arith.addf %21, %32 : vector<8x1xf32>
    %34 = arith.mulf %28, %28 : vector<8x1xf32>
    %35 = arith.subf %33, %34 : vector<8x1xf32>
    %cst_18 = arith.constant 0.000000e+00 : f32
    %36 = vector.broadcast %cst_18 : f32 to vector<8x1xf32>
    %37 = arith.maximumf %35, %36 : vector<8x1xf32>
    %cst_19 = arith.constant 9.99999974E-6 : f32
    %38 = vector.broadcast %cst_19 : f32 to vector<8x1xf32>
    %39 = arith.addf %37, %38 : vector<8x1xf32>
    %40 = math.rsqrt %39 : vector<8x1xf32>
    %41 = vector.broadcast %28 : vector<8x1xf32> to vector<8x256xf32>
    %42 = arith.subf %10, %41 : vector<8x256xf32>
    %43 = vector.broadcast %40 : vector<8x1xf32> to vector<8x256xf32>
    %44 = arith.mulf %42, %43 : vector<8x256xf32>
    %cst_20 = arith.constant 0.000000e+00 : f32
    %45 = vector.broadcast %cst_20 : f32 to vector<8x256xf32>
    %46 = arith.maximumf %44, %45 : vector<8x256xf32>
    %47 = arith.mulf %46, %7 : vector<8x256xf32>
    %c0_21 = arith.constant 0 : index
    %c0_22 = arith.constant 0 : index
    %48 = vector.load %arg4[%c0_21, %c0_22] : memref<8x8xf32, #tpu.memory_space<vmem>>, vector<8x8xf32>
    %cst_23 = arith.constant dense<0.000000e+00> : vector<8x256xf32>
    %49 = tpu.matmul %48, %47, %cst_23 {dimension_numbers = #tpu.dot_dimension_numbers<[1], [0], [0], [1], [0, 0, 1, 1], [], []>} : vector<8x8xf32>, vector<8x256xf32>, vector<8x256xf32> -> vector<8x256xf32>
    %50 = vector.broadcast %28 : vector<8x1xf32> to vector<8x256xf32>
    %51 = arith.subf %24, %50 : vector<8x256xf32>
    %52 = vector.broadcast %40 : vector<8x1xf32> to vector<8x256xf32>
    %53 = arith.mulf %51, %52 : vector<8x256xf32>
    %cst_24 = arith.constant 0.000000e+00 : f32
    %54 = vector.broadcast %cst_24 : f32 to vector<8x256xf32>
    %55 = arith.maximumf %53, %54 : vector<8x256xf32>
    %56 = arith.mulf %55, %7 : vector<8x256xf32>
    %c0_25 = arith.constant 0 : index
    %c0_26 = arith.constant 0 : index
    %57 = vector.load %arg4[%c0_25, %c0_26] : memref<8x8xf32, #tpu.memory_space<vmem>>, vector<8x8xf32>
    %cst_27 = arith.constant dense<0.000000e+00> : vector<8x256xf32>
    %58 = tpu.matmul %57, %56, %cst_27 {dimension_numbers = #tpu.dot_dimension_numbers<[1], [0], [0], [1], [0, 0, 1, 1], [], []>} : vector<8x8xf32>, vector<8x256xf32>, vector<8x256xf32> -> vector<8x256xf32>
    %cst_28 = arith.constant 0.000000e+00 : f32
    %59 = vector.broadcast %cst_28 : f32 to vector<272x256xf32>
    %c0_29 = arith.constant 0 : index
    %c0_30 = arith.constant 0 : index
    %60 = vector.load %arg8[%c0_29, %c0_30] : memref<272x256xf32, #tpu.memory_space<vmem>>, vector<272x256xf32>
    tpu.vector_store %arg8[%c0_29, %c0_30], %59 {strides = array<i32>} : memref<272x256xf32, #tpu.memory_space<vmem>>, vector<272x256xf32>,
    %c0_31 = arith.constant 0 : index
    %c0_32 = arith.constant 0 : index
    %61 = vector.load %arg2[%c0_31, %c0_32] : memref<256x256xf32, #tpu.memory_space<vmem>>, vector<256x256xf32>
    %c0_33 = arith.constant 0 : index
    %c0_34 = arith.constant 0 : index
    %62 = vector.load %arg8[%c0_33, %c0_34] : memref<272x256xf32, #tpu.memory_space<vmem>>, vector<256x256xf32>
    tpu.vector_store %arg8[%c0_33, %c0_34], %61 {strides = array<i32>} : memref<272x256xf32, #tpu.memory_space<vmem>>, vector<256x256xf32>,
    %cst_35 = arith.constant 0.000000e+00 : f32
    %63 = vector.broadcast %cst_35 : f32 to vector<8x272xf32>
    %c0_36 = arith.constant 0 : index
    %c0_37 = arith.constant 0 : index
    %64 = vector.load %arg9[%c0_36, %c0_37] : memref<8x272xf32, #tpu.memory_space<vmem>>, vector<8x272xf32>
    tpu.vector_store %arg9[%c0_36, %c0_37], %63 {strides = array<i32>} : memref<8x272xf32, #tpu.memory_space<vmem>>, vector<8x272xf32>,
    %c0_38 = arith.constant 0 : index
    %c0_39 = arith.constant 0 : index
    %65 = vector.load %arg5[%c0_38, %c0_39] : memref<8x8xf32, #tpu.memory_space<vmem>>, vector<8x8xf32>
    %c0_40 = arith.constant 0 : index
    %c256 = arith.constant 256 : index
    %66 = vector.load %arg9[%c0_40, %c256] : memref<8x272xf32, #tpu.memory_space<vmem>>, vector<8x8xf32>
    tpu.vector_store %arg9[%c0_40, %c256], %65 {strides = array<i32>} : memref<8x272xf32, #tpu.memory_space<vmem>>, vector<8x8xf32>,
    %c0_41 = arith.constant 0 : index
    %c0_42 = arith.constant 0 : index
    %67 = vector.load %arg0[%c0_41, %c0_42] : memref<16x256xf32, #tpu.memory_space<vmem>>, vector<8x256xf32>
    %c256_43 = arith.constant 256 : index
    %c0_44 = arith.constant 0 : index
    %68 = vector.load %arg8[%c256_43, %c0_44] : memref<272x256xf32, #tpu.memory_space<vmem>>, vector<8x256xf32>
    tpu.vector_store %arg8[%c256_43, %c0_44], %67 {strides = array<i32>} : memref<272x256xf32, #tpu.memory_space<vmem>>, vector<8x256xf32>,
    %c0_45 = arith.constant 0 : index
    %c0_46 = arith.constant 0 : index
    %69 = vector.load %arg9[%c0_45, %c0_46] : memref<8x272xf32, #tpu.memory_space<vmem>>, vector<8x256xf32>
    tpu.vector_store %arg9[%c0_45, %c0_46], %49 {strides = array<i32>} : memref<8x272xf32, #tpu.memory_space<vmem>>, vector<8x256xf32>,
    %c0_47 = arith.constant 0 : index
    %c0_48 = arith.constant 0 : index
    %70 = vector.load %arg9[%c0_47, %c0_48] : memref<8x272xf32, #tpu.memory_space<vmem>>, vector<8x272xf32>
    %c0_49 = arith.constant 0 : index
    %c0_50 = arith.constant 0 : index
    %71 = vector.load %arg8[%c0_49, %c0_50] : memref<272x256xf32, #tpu.memory_space<vmem>>, vector<272x256xf32>
    %cst_51 = arith.constant dense<0.000000e+00> : vector<8x256xf32>
    %72 = tpu.matmul %70, %71, %cst_51 {dimension_numbers = #tpu.dot_dimension_numbers<[1], [0], [0], [1], [0, 0, 1, 1], [], []>} : vector<8x272xf32>, vector<272x256xf32>, vector<8x256xf32> -> vector<8x256xf32>
    %c0_52 = arith.constant 0 : index
    %c0_53 = arith.constant 0 : index
    %c0_54 = arith.constant 0 : index
    %73 = vector.load %arg7[%c0_52, %c0_53, %c0_54] : memref<2x8x256xf32, #tpu.memory_space<vmem>>, vector<1x8x256xf32>
    %74 = vector.shape_cast %73 : vector<1x8x256xf32> to vector<8x256xf32>
    %75 = vector.shape_cast %72 : vector<8x256xf32> to vector<1x8x256xf32>
    tpu.vector_store %arg7[%c0_52, %c0_53, %c0_54], %75 {strides = array<i32>} : memref<2x8x256xf32, #tpu.memory_space<vmem>>, vector<1x8x256xf32>,
    %cst_55 = arith.constant dense<0.000000e+00> : vector<8xf32>
    %76 = vector.multi_reduction <add>, %72, %cst_55 [1] : vector<8x256xf32> to vector<8xf32>
    %77 = vector.shape_cast %76 : vector<8xf32> to vector<8x1xf32>
    %cst_56 = arith.constant 0.000000e+00 : f32
    %78 = vector.broadcast %cst_56 : f32 to vector<8x1xf32>
    %79 = arith.addf %78, %77 : vector<8x1xf32>
    %80 = arith.mulf %72, %72 : vector<8x256xf32>
    %cst_57 = arith.constant dense<0.000000e+00> : vector<8xf32>
    %81 = vector.multi_reduction <add>, %80, %cst_57 [1] : vector<8x256xf32> to vector<8xf32>
    %82 = vector.shape_cast %81 : vector<8xf32> to vector<8x1xf32>
    %cst_58 = arith.constant 0.000000e+00 : f32
    %83 = vector.broadcast %cst_58 : f32 to vector<8x1xf32>
    %84 = arith.addf %83, %82 : vector<8x1xf32>
    %c8 = arith.constant 8 : index
    %c0_59 = arith.constant 0 : index
    %85 = vector.load %arg0[%c8, %c0_59] : memref<16x256xf32, #tpu.memory_space<vmem>>, vector<8x256xf32>
    %c256_60 = arith.constant 256 : index
    %c0_61 = arith.constant 0 : index
    %86 = vector.load %arg8[%c256_60, %c0_61] : memref<272x256xf32, #tpu.memory_space<vmem>>, vector<8x256xf32>
    tpu.vector_store %arg8[%c256_60, %c0_61], %85 {strides = array<i32>} : memref<272x256xf32, #tpu.memory_space<vmem>>, vector<8x256xf32>,
    %c0_62 = arith.constant 0 : index
    %c0_63 = arith.constant 0 : index
    %87 = vector.load %arg9[%c0_62, %c0_63] : memref<8x272xf32, #tpu.memory_space<vmem>>, vector<8x256xf32>
    tpu.vector_store %arg9[%c0_62, %c0_63], %58 {strides = array<i32>} : memref<8x272xf32, #tpu.memory_space<vmem>>, vector<8x256xf32>,
    %c0_64 = arith.constant 0 : index
    %c0_65 = arith.constant 0 : index
    %88 = vector.load %arg9[%c0_64, %c0_65] : memref<8x272xf32, #tpu.memory_space<vmem>>, vector<8x272xf32>
    %c0_66 = arith.constant 0 : index
    %c0_67 = arith.constant 0 : index
    %89 = vector.load %arg8[%c0_66, %c0_67] : memref<272x256xf32, #tpu.memory_space<vmem>>, vector<272x256xf32>
    %cst_68 = arith.constant dense<0.000000e+00> : vector<8x256xf32>
    %90 = tpu.matmul %88, %89, %cst_68 {dimension_numbers = #tpu.dot_dimension_numbers<[1], [0], [0], [1], [0, 0, 1, 1], [], []>} : vector<8x272xf32>, vector<272x256xf32>, vector<8x256xf32> -> vector<8x256xf32>
    %c1 = arith.constant 1 : index
    %c0_69 = arith.constant 0 : index
    %c0_70 = arith.constant 0 : index
    %91 = vector.load %arg7[%c1, %c0_69, %c0_70] : memref<2x8x256xf32, #tpu.memory_space<vmem>>, vector<1x8x256xf32>
    %92 = vector.shape_cast %91 : vector<1x8x256xf32> to vector<8x256xf32>
    %93 = vector.shape_cast %90 : vector<8x256xf32> to vector<1x8x256xf32>
    tpu.vector_store %arg7[%c1, %c0_69, %c0_70], %93 {strides = array<i32>} : memref<2x8x256xf32, #tpu.memory_space<vmem>>, vector<1x8x256xf32>,
    %cst_71 = arith.constant dense<0.000000e+00> : vector<8xf32>
    %94 = vector.multi_reduction <add>, %90, %cst_71 [1] : vector<8x256xf32> to vector<8xf32>
    %95 = vector.shape_cast %94 : vector<8xf32> to vector<8x1xf32>
    %96 = arith.addf %79, %95 : vector<8x1xf32>
    %97 = arith.mulf %90, %90 : vector<8x256xf32>
    %cst_72 = arith.constant dense<0.000000e+00> : vector<8xf32>
    %98 = vector.multi_reduction <add>, %97, %cst_72 [1] : vector<8x256xf32> to vector<8xf32>
    %99 = vector.shape_cast %98 : vector<8xf32> to vector<8x1xf32>
    %100 = arith.addf %84, %99 : vector<8x1xf32>
    %cst_73 = arith.constant 4.320000e+02 : f32
    %101 = vector.broadcast %cst_73 : f32 to vector<8x1xf32>
    %102 = arith.divf %96, %101 : vector<8x1xf32>
    %cst_74 = arith.constant 4.320000e+02 : f32
    %103 = vector.broadcast %cst_74 : f32 to vector<8x1xf32>
    %104 = arith.divf %100, %103 : vector<8x1xf32>
    %105 = arith.mulf %102, %102 : vector<8x1xf32>
    %106 = arith.subf %104, %105 : vector<8x1xf32>
    %cst_75 = arith.constant 0.000000e+00 : f32
    %107 = vector.broadcast %cst_75 : f32 to vector<8x1xf32>
    %108 = arith.maximumf %106, %107 : vector<8x1xf32>
    %cst_76 = arith.constant 9.99999974E-6 : f32
    %109 = vector.broadcast %cst_76 : f32 to vector<8x1xf32>
    %110 = arith.addf %108, %109 : vector<8x1xf32>
    %111 = math.rsqrt %110 : vector<8x1xf32>
    %c0_77 = arith.constant 0 : index
    %c0_78 = arith.constant 0 : index
    %c0_79 = arith.constant 0 : index
    %112 = vector.load %arg7[%c0_77, %c0_78, %c0_79] : memref<2x8x256xf32, #tpu.memory_space<vmem>>, vector<1x8x256xf32>
    %113 = vector.shape_cast %112 : vector<1x8x256xf32> to vector<8x256xf32>
    %114 = vector.broadcast %102 : vector<8x1xf32> to vector<8x256xf32>
    %115 = arith.subf %113, %114 : vector<8x256xf32>
    %116 = vector.broadcast %111 : vector<8x1xf32> to vector<8x256xf32>
    %117 = arith.mulf %115, %116 : vector<8x256xf32>
    %cst_80 = arith.constant 0.000000e+00 : f32
    %118 = vector.broadcast %cst_80 : f32 to vector<8x256xf32>
    %119 = arith.maximumf %117, %118 : vector<8x256xf32>
    %c0_81 = arith.constant 0 : index
    %c0_82 = arith.constant 0 : index
    %c0_83 = arith.constant 0 : index
    %120 = vector.load %arg7[%c0_81, %c0_82, %c0_83] : memref<2x8x256xf32, #tpu.memory_space<vmem>>, vector<1x8x256xf32>
    %121 = vector.shape_cast %120 : vector<1x8x256xf32> to vector<8x256xf32>
    %122 = vector.shape_cast %119 : vector<8x256xf32> to vector<1x8x256xf32>
    tpu.vector_store %arg7[%c0_81, %c0_82, %c0_83], %122 {strides = array<i32>} : memref<2x8x256xf32, #tpu.memory_space<vmem>>, vector<1x8x256xf32>,
    %c1_84 = arith.constant 1 : index
    %c0_85 = arith.constant 0 : index
    %c0_86 = arith.constant 0 : index
    %123 = vector.load %arg7[%c1_84, %c0_85, %c0_86] : memref<2x8x256xf32, #tpu.memory_space<vmem>>, vector<1x8x256xf32>
    %124 = vector.shape_cast %123 : vector<1x8x256xf32> to vector<8x256xf32>
    %125 = vector.broadcast %102 : vector<8x1xf32> to vector<8x256xf32>
    %126 = arith.subf %124, %125 : vector<8x256xf32>
    %127 = vector.broadcast %111 : vector<8x1xf32> to vector<8x256xf32>
    %128 = arith.mulf %126, %127 : vector<8x256xf32>
    %cst_87 = arith.constant 0.000000e+00 : f32
    %129 = vector.broadcast %cst_87 : f32 to vector<8x256xf32>
    %130 = arith.maximumf %128, %129 : vector<8x256xf32>
    %c1_88 = arith.constant 1 : index
    %c0_89 = arith.constant 0 : index
    %c0_90 = arith.constant 0 : index
    %131 = vector.load %arg7[%c1_88, %c0_89, %c0_90] : memref<2x8x256xf32, #tpu.memory_space<vmem>>, vector<1x8x256xf32>
    %132 = vector.shape_cast %131 : vector<1x8x256xf32> to vector<8x256xf32>
    %133 = vector.shape_cast %130 : vector<8x256xf32> to vector<1x8x256xf32>
    tpu.vector_store %arg7[%c1_88, %c0_89, %c0_90], %133 {strides = array<i32>} : memref<2x8x256xf32, #tpu.memory_space<vmem>>, vector<1x8x256xf32>,
    return
  }
}

</mosaic_0001>

<llo_original>
// kernel: pyramid_pooling_forward.1
$region0: #{pyramid_pooling_forward.1}
  #allocation0 [shape = 'u32[]', space=smem, size = 0x4, offset = 0x4, fixed_abs, tag = 'smem constant byte address 0x4 - core index']
  #allocation1 [shape = 'u32[72,128]{1,0:T(1,128)}', space=vmem, size = 0x9000, scoped, tag = 'internal scratch']
  #allocation2 [shape = 'f32[272,256]{1,0:T(8,128)}', space=vmem, size = 0x44000, scoped, tag = 'scratch operand']
  #allocation3 [shape = 'f32[8,272]{1,0:T(8,128)}', space=vmem, size = 0x3000, scoped, tag = 'scratch operand']
  %s0 = inlined_call_operand.vmem [shape: f32[16,256], index: 0, kind: input, shape index: {}]
  %s1 = inlined_call_operand.hbm [shape: f32[256,256], index: 1, kind: input, shape index: {}]
  %s2 = inlined_call_operand.vmem [shape: f32[256,256], index: 2, kind: input, shape index: {}]
  %s3 = inlined_call_operand.vmem [shape: f32[8,8], index: 3, kind: input, shape index: {}]
  %s4 = inlined_call_operand.vmem [shape: f32[8,8], index: 4, kind: input, shape index: {}]
  %s5 = inlined_call_operand.vmem [shape: f32[8,8], index: 5, kind: input, shape index: {}]
  %s6 = inlined_call_operand.vmem [shape: f32[8,256], index: 6, kind: input, shape index: {}]
  %s7 = inlined_call_operand.vmem [shape: f32[2,8,256], index: 7, kind: output, shape index: {}]
  %s8 = sld [smem:[#allocation0]]
  $region42: #{pyramid_pooling_forward.1} parent=0
    _
  %s10 = ssub.s32 1, %s8
  %s11 = scalar_select 0, %s10, %s8
  $region1: #{pyramid_pooling_forward.1} parent=0
    #allocation4 [shape = 'u8[262144]{0}', space=vmem, size = 0x40000, scoped, tag = 'input window, operand 1, single buffered']
    #allocation5 [shape = 's32[1]{0}', space=sflag, size = 0x4, scoped, tag = 'scoped memory for pyramid_pooling_forward.1']
    %12 = vsyncpa [#allocation5], 0
    // Predicated region
    $region2: #{pyramid_pooling_forward.1} parent=1 // pred_check
      _
    $region3: #{pyramid_pooling_forward.1} parent=1 // pred_check_branch
      %14 = sbr.rel (0) target = $region5
    $region4: #{pyramid_pooling_forward.1} parent=1 // pred_region
      _
    $region5: #{pyramid_pooling_forward.1} parent=1 // pred_fallthru
      _
    // Predicated region
    $region6: #{pyramid_pooling_forward.1} parent=1 // pred_check
      _
    $region7: #{pyramid_pooling_forward.1} parent=1 // pred_check_branch
      %16 = sbr.rel (0) target = $region9
    $region8: #{pyramid_pooling_forward.1} parent=1 // pred_region
      %18 = vsyncadd [#allocation5], 0
      %s19 = sshll.u32 %s1, 4
      %s20 = int_to_ptr.hbm [resolvable:$true] %s19
      %s21 = sshll.u32 [#allocation4], 4
      %s22 = int_to_ptr.vmem [resolvable:$true] %s21
      %27 = dma.hbm_to_vmem [thread:$0]  %s20, 8192, %s22, [#allocation5], 256, 256, 16
    $region9: #{pyramid_pooling_forward.1} parent=1 // pred_fallthru
      _
    // Predicated region
    $region10: #{pyramid_pooling_forward.1} parent=1 // pred_check
      _
    $region11: #{pyramid_pooling_forward.1} parent=1 // pred_check_branch
      %29 = sbr.rel (0) target = $region13
    $region12: #{pyramid_pooling_forward.1} parent=1 // pred_region
      _
    $region13: #{pyramid_pooling_forward.1} parent=1 // pred_fallthru
      _
    // Predicated region
    $region14: #{pyramid_pooling_forward.1} parent=1 // pred_check
      _
    $region15: #{pyramid_pooling_forward.1} parent=1 // pred_check_branch
      %31 = sbr.rel (0) target = $region17
    $region16: #{pyramid_pooling_forward.1} parent=1 // pred_region
      _
    $region17: #{pyramid_pooling_forward.1} parent=1 // pred_fallthru
      _
    // Predicated region
    $region18: #{pyramid_pooling_forward.1} parent=1 // pred_check
      _
    $region19: #{pyramid_pooling_forward.1} parent=1 // pred_check_branch
      %33 = sbr.rel (0) target = $region21
    $region20: #{pyramid_pooling_forward.1} parent=1 // pred_region
      _
    $region21: #{pyramid_pooling_forward.1} parent=1 // pred_fallthru
      _
    // Predicated region
    $region22: #{pyramid_pooling_forward.1} parent=1 // pred_check
      _
    $region23: #{pyramid_pooling_forward.1} parent=1 // pred_check_branch
      %35 = sbr.rel (0) target = $region25
    $region24: #{pyramid_pooling_forward.1} parent=1 // pred_region
      _
    $region25: #{pyramid_pooling_forward.1} parent=1 // pred_fallthru
      _
    // Predicated region
    $region26: #{pyramid_pooling_forward.1} parent=1 // pred_check
      _
    $region27: #{pyramid_pooling_forward.1} parent=1 // pred_check_branch
      %37 = sbr.rel (0) target = $region29
    $region28: #{pyramid_pooling_forward.1} parent=1 // pred_region
      _
    $region29: #{pyramid_pooling_forward.1} parent=1 // pred_fallthru
      _
    // Predicated region
    $region30: #{pyramid_pooling_forward.1} parent=1 // pred_check
      _
    $region31: #{pyramid_pooling_forward.1} parent=1 // pred_check_branch
      %39 = sbr.rel (0) target = $region33
    $region32: #{pyramid_pooling_forward.1} parent=1 // pred_region
      %41 = dma.done [#allocation5], 8192
    $region33: #{pyramid_pooling_forward.1} parent=1 // pred_fallthru
      _
    %v42 = vld [vmem:[%s0] sm:$0xff]
    %v43 = vld [vmem:[%s0 + $0x8] sm:$0xff]
    %v44 = vld [vmem:[%s0 + $0x10] sm:$0xff]
    %v45 = vld [vmem:[%s0 + $0x18] sm:$0xff]
    %v46 = vld [vmem:[#allocation4] sm:$0xff]
    %v47 = vld [vmem:[#allocation4 + $0x8] sm:$0xff]
    %v48 = vld [vmem:[#allocation4 + $0x10] sm:$0xff]
    %v49 = vld [vmem:[#allocation4 + $0x18] sm:$0xff]
    %v50 = vld [vmem:[#allocation4 + $0x20] sm:$0xff]
    %v51 = vld [vmem:[#allocation4 + $0x28] sm:$0xff]
    %v52 = vld [vmem:[#allocation4 + $0x30] sm:$0xff]
    %v53 = vld [vmem:[#allocation4 + $0x38] sm:$0xff]
    %v54 = vld [vmem:[#allocation4 + $0x40] sm:$0xff]
    %v55 = vld [vmem:[#allocation4 + $0x48] sm:$0xff]
    %v56 = vld [vmem:[#allocation4 + $0x50] sm:$0xff]
    %v57 = vld [vmem:[#allocation4 + $0x58] sm:$0xff]
    %v58 = vld [vmem:[#allocation4 + $0x60] sm:$0xff]
    %v59 = vld [vmem:[#allocation4 + $0x68] sm:$0xff]
    %v60 = vld [vmem:[#allocation4 + $0x70] sm:$0xff]
    %v61 = vld [vmem:[#allocation4 + $0x78] sm:$0xff]
    %v62 = vld [vmem:[#allocation4 + $0x80] sm:$0xff]
    %v63 = vld [vmem:[#allocation4 + $0x88] sm:$0xff]
    %v64 = vld [vmem:[#allocation4 + $0x90] sm:$0xff]
    %v65 = vld [vmem:[#allocation4 + $0x98] sm:$0xff]
    %v66 = vld [vmem:[#allocation4 + $0xa0] sm:$0xff]
    %v67 = vld [vmem:[#allocation4 + $0xa8] sm:$0xff]
    %v68 = vld [vmem:[#allocation4 + $0xb0] sm:$0xff]
    %v69 = vld [vmem:[#allocation4 + $0xb8] sm:$0xff]
    %v70 = vld [vmem:[#allocation4 + $0xc0] sm:$0xff]
    %v71 = vld [vmem:[#allocation4 + $0xc8] sm:$0xff]
    %v72 = vld [vmem:[#allocation4 + $0xd0] sm:$0xff]
    %v73 = vld [vmem:[#allocation4 + $0xd8] sm:$0xff]
    %v74 = vld [vmem:[#allocation4 + $0xe0] sm:$0xff]
    %v75 = vld [vmem:[#allocation4 + $0xe8] sm:$0xff]
    %v76 = vld [vmem:[#allocation4 + $0xf0] sm:$0xff]
    %v77 = vld [vmem:[#allocation4 + $0xf8] sm:$0xff]
    %v78 = vld [vmem:[#allocation4 + $0x100] sm:$0xff]
    %v79 = vld [vmem:[#allocation4 + $0x108] sm:$0xff]
    %v80 = vld [vmem:[#allocation4 + $0x110] sm:$0xff]
    %v81 = vld [vmem:[#allocation4 + $0x118] sm:$0xff]
    %v82 = vld [vmem:[#allocation4 + $0x120] sm:$0xff]
    %v83 = vld [vmem:[#allocation4 + $0x128] sm:$0xff]
    %v84 = vld [vmem:[#allocation4 + $0x130] sm:$0xff]
    %v85 = vld [vmem:[#allocation4 + $0x138] sm:$0xff]
    %v86 = vld [vmem:[#allocation4 + $0x140] sm:$0xff]
    %v87 = vld [vmem:[#allocation4 + $0x148] sm:$0xff]
    %v88 = vld [vmem:[#allocation4 + $0x150] sm:$0xff]
    %v89 = vld [vmem:[#allocation4 + $0x158] sm:$0xff]
    %v90 = vld [vmem:[#allocation4 + $0x160] sm:$0xff]
    %v91 = vld [vmem:[#allocation4 + $0x168] sm:$0xff]
    %v92 = vld [vmem:[#allocation4 + $0x170] sm:$0xff]
    %v93 = vld [vmem:[#allocation4 + $0x178] sm:$0xff]
    %v94 = vld [vmem:[#allocation4 + $0x180] sm:$0xff]
    %v95 = vld [vmem:[#allocation4 + $0x188] sm:$0xff]
    %v96 = vld [vmem:[#allocation4 + $0x190] sm:$0xff]
    %v97 = vld [vmem:[#allocation4 + $0x198] sm:$0xff]
    %v98 = vld [vmem:[#allocation4 + $0x1a0] sm:$0xff]
    %v99 = vld [vmem:[#allocation4 + $0x1a8] sm:$0xff]
    %v100 = vld [vmem:[#allocation4 + $0x1b0] sm:$0xff]
    %v101 = vld [vmem:[#allocation4 + $0x1b8] sm:$0xff]
    %v102 = vld [vmem:[#allocation4 + $0x1c0] sm:$0xff]
    %v103 = vld [vmem:[#allocation4 + $0x1c8] sm:$0xff]
    %v104 = vld [vmem:[#allocation4 + $0x1d0] sm:$0xff]
    %v105 = vld [vmem:[#allocation4 + $0x1d8] sm:$0xff]
    %v106 = vld [vmem:[#allocation4 + $0x1e0] sm:$0xff]
    %v107 = vld [vmem:[#allocation4 + $0x1e8] sm:$0xff]
    %v108 = vld [vmem:[#allocation4 + $0x1f0] sm:$0xff]
    %v109 = vld [vmem:[#allocation4 + $0x1f8] sm:$0xff]
    %110 = vmatpush.msra.mxu0 %v76
    %111 = vmatpush.msra.mxu0 %v74
    %112 = vmatpush.msra.mxu0 %v72
    %113 = vmatpush.msra.mxu0 %v70
    %114 = vmatpush.msra.mxu0 %v68
    %115 = vmatpush.msra.mxu0 %v66
    %116 = vmatpush.msra.mxu0 %v64
    %117 = vmatpush.msra.mxu0 %v62
    %118 = vmatpush.msra.mxu0 %v60
    %119 = vmatpush.msra.mxu0 %v58
    %120 = vmatpush.msra.mxu0 %v56
    %121 = vmatpush.msra.mxu0 %v54
    %122 = vmatpush.msra.mxu0 %v52
    %123 = vmatpush.msra.mxu0 %v50
    %124 = vmatpush.msra.mxu0 %v48
    %125 = vmatpush.msra.mxu0 %v46
    %126 = vmatmul.f32.gmra.mxu0 %v42
    %v127 = vpop.f32.mrf.mxu0
    %v128 = vadd.f32 0.0, %v127
    %129 = vmatmul.f32.gmra.mxu0 %v44
    %v130 = vpop.f32.mrf.mxu0
    %v131 = vadd.f32 0.0, %v130
    %132 = vdwg.mxu0
    %133 = vmatpush.msra.mxu0 %v108
    %134 = vmatpush.msra.mxu0 %v106
    %135 = vmatpush.msra.mxu0 %v104
    %136 = vmatpush.msra.mxu0 %v102
    %137 = vmatpush.msra.mxu0 %v100
    %138 = vmatpush.msra.mxu0 %v98
    %139 = vmatpush.msra.mxu0 %v96
    %140 = vmatpush.msra.mxu0 %v94
    %141 = vmatpush.msra.mxu0 %v92
    %142 = vmatpush.msra.mxu0 %v90
    %143 = vmatpush.msra.mxu0 %v88
    %144 = vmatpush.msra.mxu0 %v86
    %145 = vmatpush.msra.mxu0 %v84
    %146 = vmatpush.msra.mxu0 %v82
    %147 = vmatpush.msra.mxu0 %v80
    %148 = vmatpush.msra.mxu0 %v78
    %149 = vmatmul.f32.gmra.mxu0 %v43
    %v150 = vpop.f32.mrf.mxu0
    %v151 = vadd.f32 %v128, %v150
    %152 = vmatmul.f32.gmra.mxu0 %v45
    %v153 = vpop.f32.mrf.mxu0
    %v154 = vadd.f32 %v131, %v153
    %155 = vdwg.mxu0
    %156 = vmatpush.msra.mxu0 %v77
    %157 = vmatpush.msra.mxu0 %v75
    %158 = vmatpush.msra.mxu0 %v73
    %159 = vmatpush.msra.mxu0 %v71
    %160 = vmatpush.msra.mxu0 %v69
    %161 = vmatpush.msra.mxu0 %v67
    %162 = vmatpush.msra.mxu0 %v65
    %163 = vmatpush.msra.mxu0 %v63
    %164 = vmatpush.msra.mxu0 %v61
    %165 = vmatpush.msra.mxu0 %v59
    %166 = vmatpush.msra.mxu0 %v57
    %167 = vmatpush.msra.mxu0 %v55
    %168 = vmatpush.msra.mxu0 %v53
    %169 = vmatpush.msra.mxu0 %v51
    %170 = vmatpush.msra.mxu0 %v49
    %171 = vmatpush.msra.mxu0 %v47
    %172 = vmatmul.f32.gmra.mxu0 %v42
    %v173 = vpop.f32.mrf.mxu0
    %v174 = vadd.f32 0.0, %v173
    %175 = vmatmul.f32.gmra.mxu0 %v44
    %v176 = vpop.f32.mrf.mxu0
    %v177 = vadd.f32 0.0, %v176
    %178 = vdwg.mxu0
    %179 = vmatpush.msra.mxu0 %v109
    %180 = vmatpush.msra.mxu0 %v107
    %181 = vmatpush.msra.mxu0 %v105
    %182 = vmatpush.msra.mxu0 %v103
    %183 = vmatpush.msra.mxu0 %v101
    %184 = vmatpush.msra.mxu0 %v99
    %185 = vmatpush.msra.mxu0 %v97
    %186 = vmatpush.msra.mxu0 %v95
    %187 = vmatpush.msra.mxu0 %v93
    %188 = vmatpush.msra.mxu0 %v91
    %189 = vmatpush.msra.mxu0 %v89
    %190 = vmatpush.msra.mxu0 %v87
    %191 = vmatpush.msra.mxu0 %v85
    %192 = vmatpush.msra.mxu0 %v83
    %193 = vmatpush.msra.mxu0 %v81
    %194 = vmatpush.msra.mxu0 %v79
    %195 = vmatmul.f32.gmra.mxu0 %v43
    %v196 = vpop.f32.mrf.mxu0
    %v197 = vadd.f32 %v174, %v196
    %198 = vmatmul.f32.gmra.mxu0 %v45
    %v199 = vpop.f32.mrf.mxu0
    %v200 = vadd.f32 %v177, %v199
    %201 = vdwg.mxu0
    %v202 = vld [vmem:[%s6] sm:$0xff]
    %v203 = vld [vmem:[%s6 + $0x8] sm:$0xff]
    %vm204 = vcmp.gt.f32.partialorder %v202, 0.0
    %vm205 = vcmp.gt.f32.partialorder %v203, 0.0
    %v206 = vsel %vm204, 1, 0
    %v207 = vsel %vm205, 1, 0
    %v208 = vcvt.s32.f32 %v206
    %v209 = vcvt.s32.f32 %v207
    %v210 = vld [vmem:[%s3] sm:$0xff]
    %vm211 = vcmask 64512
    %v213 = vsel %vm211, %v210, 0
    %215 = vmatpush.msra.mxu0 0.0
    %216 = vmatpush.msra.mxu0 0.0
    %217 = vmatpush.msra.mxu0 0.0
    %218 = vmatpush.msra.mxu0 0.0
    %219 = vmatpush.msra.mxu0 0.0
    %220 = vmatpush.msra.mxu0 0.0
    %221 = vmatpush.msra.mxu0 0.0
    %222 = vmatpush.msra.mxu0 0.0
    %223 = vmatpush.msra.mxu0 0.0
    %224 = vmatpush.msra.mxu0 0.0
    %225 = vmatpush.msra.mxu0 0.0
    %226 = vmatpush.msra.mxu0 0.0
    %227 = vmatpush.msra.mxu0 0.0
    %228 = vmatpush.msra.mxu0 0.0
    %229 = vmatpush.msra.mxu0 0.0
    %230 = vmatpush.msra.mxu0 %v151
    %231 = vmatmul.f32.gmra.mxu0 %v213
    %v232 = vpop.f32.mrf.mxu0
    %v233 = vadd.f32 0.0, %v232
    %234 = vdwg.mxu0
    %235 = vmatpush.msra.mxu0 0.0
    %236 = vmatpush.msra.mxu0 0.0
    %237 = vmatpush.msra.mxu0 0.0
    %238 = vmatpush.msra.mxu0 0.0
    %239 = vmatpush.msra.mxu0 0.0
    %240 = vmatpush.msra.mxu0 0.0
    %241 = vmatpush.msra.mxu0 0.0
    %242 = vmatpush.msra.mxu0 0.0
    %243 = vmatpush.msra.mxu0 0.0
    %244 = vmatpush.msra.mxu0 0.0
    %245 = vmatpush.msra.mxu0 0.0
    %246 = vmatpush.msra.mxu0 0.0
    %247 = vmatpush.msra.mxu0 0.0
    %248 = vmatpush.msra.mxu0 0.0
    %249 = vmatpush.msra.mxu0 0.0
    %250 = vmatpush.msra.mxu0 %v197
    %251 = vmatmul.f32.gmra.mxu0 %v213
    %v252 = vpop.f32.mrf.mxu0
    %v253 = vadd.f32 0.0, %v252
    %254 = vdwg.mxu0
    %v255 = vmul.f32 %v233, %v202
    %v256 = vmul.f32 %v253, %v203
    %v257 = vadd.f32 %v255, %v256
    %258 = vadd.xlane.f32.xlu0 %v257
    %v259 = vpop.xlane.xlu0 %258
    %v260 = vadd.f32 %v259, 0.0
    %v261 = vmul.f32 %v233, %v233
    %v262 = vmul.f32 %v253, %v253
    %v263 = vmul.f32 %v261, %v202
    %v264 = vmul.f32 %v262, %v203
    %v265 = vadd.f32 %v263, %v264
    %266 = vadd.xlane.f32.xlu0 %v265
    %v267 = vpop.xlane.xlu0 %266
    %v268 = vadd.f32 %v267, 0.0
    %269 = vmatpush.msra.mxu0 0.0
    %270 = vmatpush.msra.mxu0 0.0
    %271 = vmatpush.msra.mxu0 0.0
    %272 = vmatpush.msra.mxu0 0.0
    %273 = vmatpush.msra.mxu0 0.0
    %274 = vmatpush.msra.mxu0 0.0
    %275 = vmatpush.msra.mxu0 0.0
    %276 = vmatpush.msra.mxu0 0.0
    %277 = vmatpush.msra.mxu0 0.0
    %278 = vmatpush.msra.mxu0 0.0
    %279 = vmatpush.msra.mxu0 0.0
    %280 = vmatpush.msra.mxu0 0.0
    %281 = vmatpush.msra.mxu0 0.0
    %282 = vmatpush.msra.mxu0 0.0
    %283 = vmatpush.msra.mxu0 0.0
    %284 = vmatpush.msra.mxu0 %v154
    %285 = vmatmul.f32.gmra.mxu0 %v213
    %v286 = vpop.f32.mrf.mxu0
    %v287 = vadd.f32 0.0, %v286
    %288 = vdwg.mxu0
    %289 = vmatpush.msra.mxu0 0.0
    %290 = vmatpush.msra.mxu0 0.0
    %291 = vmatpush.msra.mxu0 0.0
    %292 = vmatpush.msra.mxu0 0.0
    %293 = vmatpush.msra.mxu0 0.0
    %294 = vmatpush.msra.mxu0 0.0
    %295 = vmatpush.msra.mxu0 0.0
    %296 = vmatpush.msra.mxu0 0.0
    %297 = vmatpush.msra.mxu0 0.0
    %298 = vmatpush.msra.mxu0 0.0
    %299 = vmatpush.msra.mxu0 0.0
    %300 = vmatpush.msra.mxu0 0.0
    %301 = vmatpush.msra.mxu0 0.0
    %302 = vmatpush.msra.mxu0 0.0
    %303 = vmatpush.msra.mxu0 0.0
    %304 = vmatpush.msra.mxu0 %v200
    %305 = vmatmul.f32.gmra.mxu0 %v213
    %v306 = vpop.f32.mrf.mxu0
    %v307 = vadd.f32 0.0, %v306
    %308 = vdwg.mxu0
    %v309 = vmul.f32 %v287, %v202
    %v310 = vmul.f32 %v307, %v203
    %v311 = vadd.f32 %v309, %v310
    %312 = vadd.xlane.f32.xlu0 %v311
    %v313 = vpop.xlane.xlu0 %312
    %v314 = vadd.f32 %v260, %v313
    %v315 = vmul.f32 %v287, %v287
    %v316 = vmul.f32 %v307, %v307
    %v317 = vmul.f32 %v315, %v202
    %v318 = vmul.f32 %v316, %v203
    %v319 = vadd.f32 %v317, %v318
    %320 = vadd.xlane.f32.xlu0 %v319
    %v321 = vpop.xlane.xlu0 %320
    %v322 = vadd.f32 %v268, %v321
    %v323 = vmul.f32 %v314, %v314
    %v324 = vsub.f32 %v322, %v323
    %v325 = vmax.f32 %v324, 0.0
    %v326 = vadd.f32 %v325, 1e-05
    %v327 = vrsqrt.pop %v326
    %v328 = vmul.f32 %v327, %v326
    %v329 = vmul.f32 %v328, %v327
    %v330 = vmul.f32 0.5, %v329
    %v331 = vsub.f32 1.5, %v330
    %v332 = vmul.f32 %v327, %v331
    %vm333 = vweird.f32 %v326
    %vm334 = vweird.f32 %v327
    %vm335 = vmor %vm333, %vm334
    %v336 = vsel %vm335, %v327, %v332
    %v337 = vsub.f32 %v233, %v314
    %v338 = vsub.f32 %v253, %v314
    %v339 = vmul.f32 %v337, %v336
    %v340 = vmul.f32 %v338, %v336
    %v341 = vmax.f32 %v339, 0.0
    %v342 = vmax.f32 %v340, 0.0
    %v343 = vmul.f32 %v341, %v208
    %v344 = vmul.f32 %v342, %v209
    %v345 = vld [vmem:[%s4] sm:$0xff]
    %v347 = vsel %vm211, %v345, 0
    %349 = vmatpush.msra.mxu0 0.0
    %350 = vmatpush.msra.mxu0 0.0
    %351 = vmatpush.msra.mxu0 0.0
    %352 = vmatpush.msra.mxu0 0.0
    %353 = vmatpush.msra.mxu0 0.0
    %354 = vmatpush.msra.mxu0 0.0
    %355 = vmatpush.msra.mxu0 0.0
    %356 = vmatpush.msra.mxu0 0.0
    %357 = vmatpush.msra.mxu0 0.0
    %358 = vmatpush.msra.mxu0 0.0
    %359 = vmatpush.msra.mxu0 0.0
    %360 = vmatpush.msra.mxu0 0.0
    %361 = vmatpush.msra.mxu0 0.0
    %362 = vmatpush.msra.mxu0 0.0
    %363 = vmatpush.msra.mxu0 0.0
    %364 = vmatpush.msra.mxu0 %v343
    %365 = vmatmul.f32.gmra.mxu0 %v347
    %v366 = vpop.f32.mrf.mxu0
    %v367 = vadd.f32 0.0, %v366
    %368 = vdwg.mxu0
    %369 = vmatpush.msra.mxu0 0.0
    %370 = vmatpush.msra.mxu0 0.0
    %371 = vmatpush.msra.mxu0 0.0
    %372 = vmatpush.msra.mxu0 0.0
    %373 = vmatpush.msra.mxu0 0.0
    %374 = vmatpush.msra.mxu0 0.0
    %375 = vmatpush.msra.mxu0 0.0
    %376 = vmatpush.msra.mxu0 0.0
    %377 = vmatpush.msra.mxu0 0.0
    %378 = vmatpush.msra.mxu0 0.0
    %379 = vmatpush.msra.mxu0 0.0
    %380 = vmatpush.msra.mxu0 0.0
    %381 = vmatpush.msra.mxu0 0.0
    %382 = vmatpush.msra.mxu0 0.0
    %383 = vmatpush.msra.mxu0 0.0
    %384 = vmatpush.msra.mxu0 %v344
    %385 = vmatmul.f32.gmra.mxu0 %v347
    %v386 = vpop.f32.mrf.mxu0
    %v387 = vadd.f32 0.0, %v386
    %388 = vdwg.mxu0
    %v389 = vsub.f32 %v287, %v314
    %v390 = vsub.f32 %v307, %v314
    %v391 = vmul.f32 %v389, %v336
    %v392 = vmul.f32 %v390, %v336
    %v393 = vmax.f32 %v391, 0.0
    %v394 = vmax.f32 %v392, 0.0
    %v395 = vmul.f32 %v393, %v208
    %v396 = vmul.f32 %v394, %v209
    %397 = vmatpush.msra.mxu0 0.0
    %398 = vmatpush.msra.mxu0 0.0
    %399 = vmatpush.msra.mxu0 0.0
    %400 = vmatpush.msra.mxu0 0.0
    %401 = vmatpush.msra.mxu0 0.0
    %402 = vmatpush.msra.mxu0 0.0
    %403 = vmatpush.msra.mxu0 0.0
    %404 = vmatpush.msra.mxu0 0.0
    %405 = vmatpush.msra.mxu0 0.0
    %406 = vmatpush.msra.mxu0 0.0
    %407 = vmatpush.msra.mxu0 0.0
    %408 = vmatpush.msra.mxu0 0.0
    %409 = vmatpush.msra.mxu0 0.0
    %410 = vmatpush.msra.mxu0 0.0
    %411 = vmatpush.msra.mxu0 0.0
    %412 = vmatpush.msra.mxu0 %v395
    %413 = vmatmul.f32.gmra.mxu0 %v347
    %v414 = vpop.f32.mrf.mxu0
    %v415 = vadd.f32 0.0, %v414
    %416 = vdwg.mxu0
    %417 = vmatpush.msra.mxu0 0.0
    %418 = vmatpush.msra.mxu0 0.0
    %419 = vmatpush.msra.mxu0 0.0
    %420 = vmatpush.msra.mxu0 0.0
    %421 = vmatpush.msra.mxu0 0.0
    %422 = vmatpush.msra.mxu0 0.0
    %423 = vmatpush.msra.mxu0 0.0
    %424 = vmatpush.msra.mxu0 0.0
    %425 = vmatpush.msra.mxu0 0.0
    %426 = vmatpush.msra.mxu0 0.0
    %427 = vmatpush.msra.mxu0 0.0
    %428 = vmatpush.msra.mxu0 0.0
    %429 = vmatpush.msra.mxu0 0.0
    %430 = vmatpush.msra.mxu0 0.0
    %431 = vmatpush.msra.mxu0 0.0
    %432 = vmatpush.msra.mxu0 %v396
    %433 = vmatmul.f32.gmra.mxu0 %v347
    %v434 = vpop.f32.mrf.mxu0
    %v435 = vadd.f32 0.0, %v434
    %436 = vdwg.mxu0
    %437 = vst [vmem:[#allocation2] sm:$0xff] 0.0
    %438 = vst [vmem:[#allocation2 + $0x8] sm:$0xff] 0.0
    %439 = vst [vmem:[#allocation2 + $0x10] sm:$0xff] 0.0
    %440 = vst [vmem:[#allocation2 + $0x18] sm:$0xff] 0.0
    %441 = vst [vmem:[#allocation2 + $0x20] sm:$0xff] 0.0
    %442 = vst [vmem:[#allocation2 + $0x28] sm:$0xff] 0.0
    %443 = vst [vmem:[#allocation2 + $0x30] sm:$0xff] 0.0
    %444 = vst [vmem:[#allocation2 + $0x38] sm:$0xff] 0.0
    %445 = vst [vmem:[#allocation2 + $0x40] sm:$0xff] 0.0
    %446 = vst [vmem:[#allocation2 + $0x48] sm:$0xff] 0.0
    %447 = vst [vmem:[#allocation2 + $0x50] sm:$0xff] 0.0
    %448 = vst [vmem:[#allocation2 + $0x58] sm:$0xff] 0.0
    %449 = vst [vmem:[#allocation2 + $0x60] sm:$0xff] 0.0
    %450 = vst [vmem:[#allocation2 + $0x68] sm:$0xff] 0.0
    %451 = vst [vmem:[#allocation2 + $0x70] sm:$0xff] 0.0
    %452 = vst [vmem:[#allocation2 + $0x78] sm:$0xff] 0.0
    %453 = vst [vmem:[#allocation2 + $0x80] sm:$0xff] 0.0
    %454 = vst [vmem:[#allocation2 + $0x88] sm:$0xff] 0.0
    %455 = vst [vmem:[#allocation2 + $0x90] sm:$0xff] 0.0
    %456 = vst [vmem:[#allocation2 + $0x98] sm:$0xff] 0.0
    %457 = vst [vmem:[#allocation2 + $0xa0] sm:$0xff] 0.0
    %458 = vst [vmem:[#allocation2 + $0xa8] sm:$0xff] 0.0
    %459 = vst [vmem:[#allocation2 + $0xb0] sm:$0xff] 0.0
    %460 = vst [vmem:[#allocation2 + $0xb8] sm:$0xff] 0.0
    %461 = vst [vmem:[#allocation2 + $0xc0] sm:$0xff] 0.0
    %462 = vst [vmem:[#allocation2 + $0xc8] sm:$0xff] 0.0
    %463 = vst [vmem:[#allocation2 + $0xd0] sm:$0xff] 0.0
    %464 = vst [vmem:[#allocation2 + $0xd8] sm:$0xff] 0.0
    %465 = vst [vmem:[#allocation2 + $0xe0] sm:$0xff] 0.0
    %466 = vst [vmem:[#allocation2 + $0xe8] sm:$0xff] 0.0
    %467 = vst [vmem:[#allocation2 + $0xf0] sm:$0xff] 0.0
    %468 = vst [vmem:[#allocation2 + $0xf8] sm:$0xff] 0.0
    %469 = vst [vmem:[#allocation2 + $0x100] sm:$0xff] 0.0
    %470 = vst [vmem:[#allocation2 + $0x108] sm:$0xff] 0.0
    %471 = vst [vmem:[#allocation2 + $0x110] sm:$0xff] 0.0
    %472 = vst [vmem:[#allocation2 + $0x118] sm:$0xff] 0.0
    %473 = vst [vmem:[#allocation2 + $0x120] sm:$0xff] 0.0
    %474 = vst [vmem:[#allocation2 + $0x128] sm:$0xff] 0.0
    %475 = vst [vmem:[#allocation2 + $0x130] sm:$0xff] 0.0
    %476 = vst [vmem:[#allocation2 + $0x138] sm:$0xff] 0.0
    %477 = vst [vmem:[#allocation2 + $0x140] sm:$0xff] 0.0
    %478 = vst [vmem:[#allocation2 + $0x148] sm:$0xff] 0.0
    %479 = vst [vmem:[#allocation2 + $0x150] sm:$0xff] 0.0
    %480 = vst [vmem:[#allocation2 + $0x158] sm:$0xff] 0.0
    %481 = vst [vmem:[#allocation2 + $0x160] sm:$0xff] 0.0
    %482 = vst [vmem:[#allocation2 + $0x168] sm:$0xff] 0.0
    %483 = vst [vmem:[#allocation2 + $0x170] sm:$0xff] 0.0
    %484 = vst [vmem:[#allocation2 + $0x178] sm:$0xff] 0.0
    %485 = vst [vmem:[#allocation2 + $0x180] sm:$0xff] 0.0
    %486 = vst [vmem:[#allocation2 + $0x188] sm:$0xff] 0.0
    %487 = vst [vmem:[#allocation2 + $0x190] sm:$0xff] 0.0
    %488 = vst [vmem:[#allocation2 + $0x198] sm:$0xff] 0.0
    %489 = vst [vmem:[#allocation2 + $0x1a0] sm:$0xff] 0.0
    %490 = vst [vmem:[#allocation2 + $0x1a8] sm:$0xff] 0.0
    %491 = vst [vmem:[#allocation2 + $0x1b0] sm:$0xff] 0.0
    %492 = vst [vmem:[#allocation2 + $0x1b8] sm:$0xff] 0.0
    %493 = vst [vmem:[#allocation2 + $0x1c0] sm:$0xff] 0.0
    %494 = vst [vmem:[#allocation2 + $0x1c8] sm:$0xff] 0.0
    %495 = vst [vmem:[#allocation2 + $0x1d0] sm:$0xff] 0.0
    %496 = vst [vmem:[#allocation2 + $0x1d8] sm:$0xff] 0.0
    %497 = vst [vmem:[#allocation2 + $0x1e0] sm:$0xff] 0.0
    %498 = vst [vmem:[#allocation2 + $0x1e8] sm:$0xff] 0.0
    %499 = vst [vmem:[#allocation2 + $0x1f0] sm:$0xff] 0.0
    %500 = vst [vmem:[#allocation2 + $0x1f8] sm:$0xff] 0.0
    %501 = vst [vmem:[#allocation2 + $0x200] sm:$0xff] 0.0
    %502 = vst [vmem:[#allocation2 + $0x208] sm:$0xff] 0.0
    %503 = vst [vmem:[#allocation2 + $0x210] sm:$0xff] 0.0
    %504 = vst [vmem:[#allocation2 + $0x218] sm:$0xff] 0.0
    %v505 = vld [vmem:[%s2] sm:$0xff]
    %v506 = vld [vmem:[%s2 + $0x8] sm:$0xff]
    %v507 = vld [vmem:[%s2 + $0x10] sm:$0xff]
    %v508 = vld [vmem:[%s2 + $0x18] sm:$0xff]
    %v509 = vld [vmem:[%s2 + $0x20] sm:$0xff]
    %v510 = vld [vmem:[%s2 + $0x28] sm:$0xff]
    %v511 = vld [vmem:[%s2 + $0x30] sm:$0xff]
    %v512 = vld [vmem:[%s2 + $0x38] sm:$0xff]
    %v513 = vld [vmem:[%s2 + $0x40] sm:$0xff]
    %v514 = vld [vmem:[%s2 + $0x48] sm:$0xff]
    %v515 = vld [vmem:[%s2 + $0x50] sm:$0xff]
    %v516 = vld [vmem:[%s2 + $0x58] sm:$0xff]
    %v517 = vld [vmem:[%s2 + $0x60] sm:$0xff]
    %v518 = vld [vmem:[%s2 + $0x68] sm:$0xff]
    %v519 = vld [vmem:[%s2 + $0x70] sm:$0xff]
    %v520 = vld [vmem:[%s2 + $0x78] sm:$0xff]
    %v521 = vld [vmem:[%s2 + $0x80] sm:$0xff]
    %v522 = vld [vmem:[%s2 + $0x88] sm:$0xff]
    %v523 = vld [vmem:[%s2 + $0x90] sm:$0xff]
    %v524 = vld [vmem:[%s2 + $0x98] sm:$0xff]
    %v525 = vld [vmem:[%s2 + $0xa0] sm:$0xff]
    %v526 = vld [vmem:[%s2 + $0xa8] sm:$0xff]
    %v527 = vld [vmem:[%s2 + $0xb0] sm:$0xff]
    %v528 = vld [vmem:[%s2 + $0xb8] sm:$0xff]
    %v529 = vld [vmem:[%s2 + $0xc0] sm:$0xff]
    %v530 = vld [vmem:[%s2 + $0xc8] sm:$0xff]
    %v531 = vld [vmem:[%s2 + $0xd0] sm:$0xff]
    %v532 = vld [vmem:[%s2 + $0xd8] sm:$0xff]
    %v533 = vld [vmem:[%s2 + $0xe0] sm:$0xff]
    %v534 = vld [vmem:[%s2 + $0xe8] sm:$0xff]
    %v535 = vld [vmem:[%s2 + $0xf0] sm:$0xff]
    %v536 = vld [vmem:[%s2 + $0xf8] sm:$0xff]
    %v537 = vld [vmem:[%s2 + $0x100] sm:$0xff]
    %v538 = vld [vmem:[%s2 + $0x108] sm:$0xff]
    %v539 = vld [vmem:[%s2 + $0x110] sm:$0xff]
    %v540 = vld [vmem:[%s2 + $0x118] sm:$0xff]
    %v541 = vld [vmem:[%s2 + $0x120] sm:$0xff]
    %v542 = vld [vmem:[%s2 + $0x128] sm:$0xff]
    %v543 = vld [vmem:[%s2 + $0x130] sm:$0xff]
    %v544 = vld [vmem:[%s2 + $0x138] sm:$0xff]
    %v545 = vld [vmem:[%s2 + $0x140] sm:$0xff]
    %v546 = vld [vmem:[%s2 + $0x148] sm:$0xff]
    %v547 = vld [vmem:[%s2 + $0x150] sm:$0xff]
    %v548 = vld [vmem:[%s2 + $0x158] sm:$0xff]
    %v549 = vld [vmem:[%s2 + $0x160] sm:$0xff]
    %v550 = vld [vmem:[%s2 + $0x168] sm:$0xff]
    %v551 = vld [vmem:[%s2 + $0x170] sm:$0xff]
    %v552 = vld [vmem:[%s2 + $0x178] sm:$0xff]
    %v553 = vld [vmem:[%s2 + $0x180] sm:$0xff]
    %v554 = vld [vmem:[%s2 + $0x188] sm:$0xff]
    %v555 = vld [vmem:[%s2 + $0x190] sm:$0xff]
    %v556 = vld [vmem:[%s2 + $0x198] sm:$0xff]
    %v557 = vld [vmem:[%s2 + $0x1a0] sm:$0xff]
    %v558 = vld [vmem:[%s2 + $0x1a8] sm:$0xff]
    %v559 = vld [vmem:[%s2 + $0x1b0] sm:$0xff]
    %v560 = vld [vmem:[%s2 + $0x1b8] sm:$0xff]
    %v561 = vld [vmem:[%s2 + $0x1c0] sm:$0xff]
    %v562 = vld [vmem:[%s2 + $0x1c8] sm:$0xff]
    %v563 = vld [vmem:[%s2 + $0x1d0] sm:$0xff]
    %v564 = vld [vmem:[%s2 + $0x1d8] sm:$0xff]
    %v565 = vld [vmem:[%s2 + $0x1e0] sm:$0xff]
    %v566 = vld [vmem:[%s2 + $0x1e8] sm:$0xff]
    %v567 = vld [vmem:[%s2 + $0x1f0] sm:$0xff]
    %v568 = vld [vmem:[%s2 + $0x1f8] sm:$0xff]
    %569 = vst [vmem:[#allocation2] sm:$0xff] %v505
    %570 = vst [vmem:[#allocation2 + $0x8] sm:$0xff] %v506
    %571 = vst [vmem:[#allocation2 + $0x10] sm:$0xff] %v507
    %572 = vst [vmem:[#allocation2 + $0x18] sm:$0xff] %v508
    %573 = vst [vmem:[#allocation2 + $0x20] sm:$0xff] %v509
    %574 = vst [vmem:[#allocation2 + $0x28] sm:$0xff] %v510
    %575 = vst [vmem:[#allocation2 + $0x30] sm:$0xff] %v511
    %576 = vst [vmem:[#allocation2 + $0x38] sm:$0xff] %v512
    %577 = vst [vmem:[#allocation2 + $0x40] sm:$0xff] %v513
    %578 = vst [vmem:[#allocation2 + $0x48] sm:$0xff] %v514
    %579 = vst [vmem:[#allocation2 + $0x50] sm:$0xff] %v515
    %580 = vst [vmem:[#allocation2 + $0x58] sm:$0xff] %v516
    %581 = vst [vmem:[#allocation2 + $0x60] sm:$0xff] %v517
    %582 = vst [vmem:[#allocation2 + $0x68] sm:$0xff] %v518
    %583 = vst [vmem:[#allocation2 + $0x70] sm:$0xff] %v519
    %584 = vst [vmem:[#allocation2 + $0x78] sm:$0xff] %v520
    %585 = vst [vmem:[#allocation2 + $0x80] sm:$0xff] %v521
    %586 = vst [vmem:[#allocation2 + $0x88] sm:$0xff] %v522
    %587 = vst [vmem:[#allocation2 + $0x90] sm:$0xff] %v523
    %588 = vst [vmem:[#allocation2 + $0x98] sm:$0xff] %v524
    %589 = vst [vmem:[#allocation2 + $0xa0] sm:$0xff] %v525
    %590 = vst [vmem:[#allocation2 + $0xa8] sm:$0xff] %v526
    %591 = vst [vmem:[#allocation2 + $0xb0] sm:$0xff] %v527
    %592 = vst [vmem:[#allocation2 + $0xb8] sm:$0xff] %v528
    %593 = vst [vmem:[#allocation2 + $0xc0] sm:$0xff] %v529
    %594 = vst [vmem:[#allocation2 + $0xc8] sm:$0xff] %v530
    %595 = vst [vmem:[#allocation2 + $0xd0] sm:$0xff] %v531
    %596 = vst [vmem:[#allocation2 + $0xd8] sm:$0xff] %v532
    %597 = vst [vmem:[#allocation2 + $0xe0] sm:$0xff] %v533
    %598 = vst [vmem:[#allocation2 + $0xe8] sm:$0xff] %v534
    %599 = vst [vmem:[#allocation2 + $0xf0] sm:$0xff] %v535
    %600 = vst [vmem:[#allocation2 + $0xf8] sm:$0xff] %v536
    %601 = vst [vmem:[#allocation2 + $0x100] sm:$0xff] %v537
    %602 = vst [vmem:[#allocation2 + $0x108] sm:$0xff] %v538
    %603 = vst [vmem:[#allocation2 + $0x110] sm:$0xff] %v539
    %604 = vst [vmem:[#allocation2 + $0x118] sm:$0xff] %v540
    %605 = vst [vmem:[#allocation2 + $0x120] sm:$0xff] %v541
    %606 = vst [vmem:[#allocation2 + $0x128] sm:$0xff] %v542
    %607 = vst [vmem:[#allocation2 + $0x130] sm:$0xff] %v543
    %608 = vst [vmem:[#allocation2 + $0x138] sm:$0xff] %v544
    %609 = vst [vmem:[#allocation2 + $0x140] sm:$0xff] %v545
    %610 = vst [vmem:[#allocation2 + $0x148] sm:$0xff] %v546
    %611 = vst [vmem:[#allocation2 + $0x150] sm:$0xff] %v547
    %612 = vst [vmem:[#allocation2 + $0x158] sm:$0xff] %v548
    %613 = vst [vmem:[#allocation2 + $0x160] sm:$0xff] %v549
    %614 = vst [vmem:[#allocation2 + $0x168] sm:$0xff] %v550
    %615 = vst [vmem:[#allocation2 + $0x170] sm:$0xff] %v551
    %616 = vst [vmem:[#allocation2 + $0x178] sm:$0xff] %v552
    %617 = vst [vmem:[#allocation2 + $0x180] sm:$0xff] %v553
    %618 = vst [vmem:[#allocation2 + $0x188] sm:$0xff] %v554
    %619 = vst [vmem:[#allocation2 + $0x190] sm:$0xff] %v555
    %620 = vst [vmem:[#allocation2 + $0x198] sm:$0xff] %v556
    %621 = vst [vmem:[#allocation2 + $0x1a0] sm:$0xff] %v557
    %622 = vst [vmem:[#allocation2 + $0x1a8] sm:$0xff] %v558
    %623 = vst [vmem:[#allocation2 + $0x1b0] sm:$0xff] %v559
    %624 = vst [vmem:[#allocation2 + $0x1b8] sm:$0xff] %v560
    %625 = vst [vmem:[#allocation2 + $0x1c0] sm:$0xff] %v561
    %626 = vst [vmem:[#allocation2 + $0x1c8] sm:$0xff] %v562
    %627 = vst [vmem:[#allocation2 + $0x1d0] sm:$0xff] %v563
    %628 = vst [vmem:[#allocation2 + $0x1d8] sm:$0xff] %v564
    %629 = vst [vmem:[#allocation2 + $0x1e0] sm:$0xff] %v565
    %630 = vst [vmem:[#allocation2 + $0x1e8] sm:$0xff] %v566
    %631 = vst [vmem:[#allocation2 + $0x1f0] sm:$0xff] %v567
    %632 = vst [vmem:[#allocation2 + $0x1f8] sm:$0xff] %v568
    %633 = vst [vmem:[#allocation3] sm:$0xff] 0.0
    %634 = vst [vmem:[#allocation3 + $0x8] sm:$0xff] 0.0
    %vm635 = vcmask 130048
    %636 = vst.msk [vmem:[#allocation3 + $0x10] sm:$0xff] %vm635, 0.0
    %v637 = vld [vmem:[%s5] sm:$0xff]
    %638 = vst.msk [vmem:[#allocation3 + $0x10] sm:$0xff] %vm211, %v637
    %v639 = vld [vmem:[%s0] sm:$0xff]
    %v640 = vld [vmem:[%s0 + $0x8] sm:$0xff]
    %641 = vst [vmem:[#allocation2 + $0x200] sm:$0xff] %v639
    %642 = vst [vmem:[#allocation2 + $0x208] sm:$0xff] %v640
    %643 = vst [vmem:[#allocation3] sm:$0xff] %v367
    %644 = vst [vmem:[#allocation3 + $0x8] sm:$0xff] %v387
    %v645 = vld [vmem:[#allocation3] sm:$0xff]
    %v646 = vld [vmem:[#allocation3 + $0x8] sm:$0xff]
    %v647 = vld [vmem:[#allocation3 + $0x10] sm:$0xff]
    %v648 = vld [vmem:[#allocation2] sm:$0xff]
    %v649 = vld [vmem:[#allocation2 + $0x8] sm:$0xff]
    %v650 = vld [vmem:[#allocation2 + $0x10] sm:$0xff]
    %v651 = vld [vmem:[#allocation2 + $0x18] sm:$0xff]
    %v652 = vld [vmem:[#allocation2 + $0x20] sm:$0xff]
    %v653 = vld [vmem:[#allocation2 + $0x28] sm:$0xff]
    %v654 = vld [vmem:[#allocation2 + $0x30] sm:$0xff]
    %v655 = vld [vmem:[#allocation2 + $0x38] sm:$0xff]
    %v656 = vld [vmem:[#allocation2 + $0x40] sm:$0xff]
    %v657 = vld [vmem:[#allocation2 + $0x48] sm:$0xff]
    %v658 = vld [vmem:[#allocation2 + $0x50] sm:$0xff]
    %v659 = vld [vmem:[#allocation2 + $0x58] sm:$0xff]
    %v660 = vld [vmem:[#allocation2 + $0x60] sm:$0xff]
    %v661 = vld [vmem:[#allocation2 + $0x68] sm:$0xff]
    %v662 = vld [vmem:[#allocation2 + $0x70] sm:$0xff]
    %v663 = vld [vmem:[#allocation2 + $0x78] sm:$0xff]
    %v664 = vld [vmem:[#allocation2 + $0x80] sm:$0xff]
    %v665 = vld [vmem:[#allocation2 + $0x88] sm:$0xff]
    %v666 = vld [vmem:[#allocation2 + $0x90] sm:$0xff]
    %v667 = vld [vmem:[#allocation2 + $0x98] sm:$0xff]
    %v668 = vld [vmem:[#allocation2 + $0xa0] sm:$0xff]
    %v669 = vld [vmem:[#allocation2 + $0xa8] sm:$0xff]
    %v670 = vld [vmem:[#allocation2 + $0xb0] sm:$0xff]
    %v671 = vld [vmem:[#allocation2 + $0xb8] sm:$0xff]
    %v672 = vld [vmem:[#allocation2 + $0xc0] sm:$0xff]
    %v673 = vld [vmem:[#allocation2 + $0xc8] sm:$0xff]
    %v674 = vld [vmem:[#allocation2 + $0xd0] sm:$0xff]
    %v675 = vld [vmem:[#allocation2 + $0xd8] sm:$0xff]
    %v676 = vld [vmem:[#allocation2 + $0xe0] sm:$0xff]
    %v677 = vld [vmem:[#allocation2 + $0xe8] sm:$0xff]
    %v678 = vld [vmem:[#allocation2 + $0xf0] sm:$0xff]
    %v679 = vld [vmem:[#allocation2 + $0xf8] sm:$0xff]
    %v680 = vld [vmem:[#allocation2 + $0x100] sm:$0xff]
    %v681 = vld [vmem:[#allocation2 + $0x108] sm:$0xff]
    %v682 = vld [vmem:[#allocation2 + $0x110] sm:$0xff]
    %v683 = vld [vmem:[#allocation2 + $0x118] sm:$0xff]
    %v684 = vld [vmem:[#allocation2 + $0x120] sm:$0xff]
    %v685 = vld [vmem:[#allocation2 + $0x128] sm:$0xff]
    %v686 = vld [vmem:[#allocation2 + $0x130] sm:$0xff]
    %v687 = vld [vmem:[#allocation2 + $0x138] sm:$0xff]
    %v688 = vld [vmem:[#allocation2 + $0x140] sm:$0xff]
    %v689 = vld [vmem:[#allocation2 + $0x148] sm:$0xff]
    %v690 = vld [vmem:[#allocation2 + $0x150] sm:$0xff]
    %v691 = vld [vmem:[#allocation2 + $0x158] sm:$0xff]
    %v692 = vld [vmem:[#allocation2 + $0x160] sm:$0xff]
    %v693 = vld [vmem:[#allocation2 + $0x168] sm:$0xff]
    %v694 = vld [vmem:[#allocation2 + $0x170] sm:$0xff]
    %v695 = vld [vmem:[#allocation2 + $0x178] sm:$0xff]
    %v696 = vld [vmem:[#allocation2 + $0x180] sm:$0xff]
    %v697 = vld [vmem:[#allocation2 + $0x188] sm:$0xff]
    %v698 = vld [vmem:[#allocation2 + $0x190] sm:$0xff]
    %v699 = vld [vmem:[#allocation2 + $0x198] sm:$0xff]
    %v700 = vld [vmem:[#allocation2 + $0x1a0] sm:$0xff]
    %v701 = vld [vmem:[#allocation2 + $0x1a8] sm:$0xff]
    %v702 = vld [vmem:[#allocation2 + $0x1b0] sm:$0xff]
    %v703 = vld [vmem:[#allocation2 + $0x1b8] sm:$0xff]
    %v704 = vld [vmem:[#allocation2 + $0x1c0] sm:$0xff]
    %v705 = vld [vmem:[#allocation2 + $0x1c8] sm:$0xff]
    %v706 = vld [vmem:[#allocation2 + $0x1d0] sm:$0xff]
    %v707 = vld [vmem:[#allocation2 + $0x1d8] sm:$0xff]
    %v708 = vld [vmem:[#allocation2 + $0x1e0] sm:$0xff]
    %v709 = vld [vmem:[#allocation2 + $0x1e8] sm:$0xff]
    %v710 = vld [vmem:[#allocation2 + $0x1f0] sm:$0xff]
    %v711 = vld [vmem:[#allocation2 + $0x1f8] sm:$0xff]
    %v712 = vld [vmem:[#allocation2 + $0x200] sm:$0xff]
    %v713 = vld [vmem:[#allocation2 + $0x208] sm:$0xff]
    %v714 = vld [vmem:[#allocation2 + $0x210] sm:$0xff]
    %v715 = vld [vmem:[#allocation2 + $0x218] sm:$0xff]
    %v717 = vsel %vm635, %v647, 0
    %719 = vmatpush.msra.mxu0 %v678
    %720 = vmatpush.msra.mxu0 %v676
    %721 = vmatpush.msra.mxu0 %v674
    %722 = vmatpush.msra.mxu0 %v672
    %723 = vmatpush.msra.mxu0 %v670
    %724 = vmatpush.msra.mxu0 %v668
    %725 = vmatpush.msra.mxu0 %v666
    %726 = vmatpush.msra.mxu0 %v664
    %727 = vmatpush.msra.mxu0 %v662
    %728 = vmatpush.msra.mxu0 %v660
    %729 = vmatpush.msra.mxu0 %v658
    %730 = vmatpush.msra.mxu0 %v656
    %731 = vmatpush.msra.mxu0 %v654
    %732 = vmatpush.msra.mxu0 %v652
    %733 = vmatpush.msra.mxu0 %v650
    %734 = vmatpush.msra.mxu0 %v648
    %735 = vmatmul.f32.gmra.mxu0 %v645
    %v736 = vpop.f32.mrf.mxu0
    %v737 = vadd.f32 0.0, %v736
    %738 = vdwg.mxu0
    %739 = vmatpush.msra.mxu0 %v710
    %740 = vmatpush.msra.mxu0 %v708
    %741 = vmatpush.msra.mxu0 %v706
    %742 = vmatpush.msra.mxu0 %v704
    %743 = vmatpush.msra.mxu0 %v702
    %744 = vmatpush.msra.mxu0 %v700
    %745 = vmatpush.msra.mxu0 %v698
    %746 = vmatpush.msra.mxu0 %v696
    %747 = vmatpush.msra.mxu0 %v694
    %748 = vmatpush.msra.mxu0 %v692
    %749 = vmatpush.msra.mxu0 %v690
    %750 = vmatpush.msra.mxu0 %v688
    %751 = vmatpush.msra.mxu0 %v686
    %752 = vmatpush.msra.mxu0 %v684
    %753 = vmatpush.msra.mxu0 %v682
    %754 = vmatpush.msra.mxu0 %v680
    %755 = vmatmul.f32.gmra.mxu0 %v646
    %v756 = vpop.f32.mrf.mxu0
    %v757 = vadd.f32 %v737, %v756
    %758 = vdwg.mxu0
    %759 = vmatpush.msra.mxu0 0.0
    %760 = vmatpush.msra.mxu0 0.0
    %761 = vmatpush.msra.mxu0 0.0
    %762 = vmatpush.msra.mxu0 0.0
    %763 = vmatpush.msra.mxu0 0.0
    %764 = vmatpush.msra.mxu0 0.0
    %765 = vmatpush.msra.mxu0 0.0
    %766 = vmatpush.msra.mxu0 0.0
    %767 = vmatpush.msra.mxu0 0.0
    %768 = vmatpush.msra.mxu0 0.0
    %769 = vmatpush.msra.mxu0 0.0
    %770 = vmatpush.msra.mxu0 0.0
    %771 = vmatpush.msra.mxu0 0.0
    %772 = vmatpush.msra.mxu0 0.0
    %773 = vmatpush.msra.mxu0 %v714
    %774 = vmatpush.msra.mxu0 %v712
    %775 = vmatmul.f32.gmra.mxu0 %v717
    %v776 = vpop.f32.mrf.mxu0
    %v777 = vadd.f32 %v757, %v776
    %778 = vdwg.mxu0
    %779 = vmatpush.msra.mxu0 %v679
    %780 = vmatpush.msra.mxu0 %v677
    %781 = vmatpush.msra.mxu0 %v675
    %782 = vmatpush.msra.mxu0 %v673
    %783 = vmatpush.msra.mxu0 %v671
    %784 = vmatpush.msra.mxu0 %v669
    %785 = vmatpush.msra.mxu0 %v667
    %786 = vmatpush.msra.mxu0 %v665
    %787 = vmatpush.msra.mxu0 %v663
    %788 = vmatpush.msra.mxu0 %v661
    %789 = vmatpush.msra.mxu0 %v659
    %790 = vmatpush.msra.mxu0 %v657
    %791 = vmatpush.msra.mxu0 %v655
    %792 = vmatpush.msra.mxu0 %v653
    %793 = vmatpush.msra.mxu0 %v651
    %794 = vmatpush.msra.mxu0 %v649
    %795 = vmatmul.f32.gmra.mxu0 %v645
    %v796 = vpop.f32.mrf.mxu0
    %v797 = vadd.f32 0.0, %v796
    %798 = vdwg.mxu0
    %799 = vmatpush.msra.mxu0 %v711
    %800 = vmatpush.msra.mxu0 %v709
    %801 = vmatpush.msra.mxu0 %v707
    %802 = vmatpush.msra.mxu0 %v705
    %803 = vmatpush.msra.mxu0 %v703
    %804 = vmatpush.msra.mxu0 %v701
    %805 = vmatpush.msra.mxu0 %v699
    %806 = vmatpush.msra.mxu0 %v697
    %807 = vmatpush.msra.mxu0 %v695
    %808 = vmatpush.msra.mxu0 %v693
    %809 = vmatpush.msra.mxu0 %v691
    %810 = vmatpush.msra.mxu0 %v689
    %811 = vmatpush.msra.mxu0 %v687
    %812 = vmatpush.msra.mxu0 %v685
    %813 = vmatpush.msra.mxu0 %v683
    %814 = vmatpush.msra.mxu0 %v681
    %815 = vmatmul.f32.gmra.mxu0 %v646
    %v816 = vpop.f32.mrf.mxu0
    %v817 = vadd.f32 %v797, %v816
    %818 = vdwg.mxu0
    %819 = vmatpush.msra.mxu0 0.0
    %820 = vmatpush.msra.mxu0 0.0
    %821 = vmatpush.msra.mxu0 0.0
    %822 = vmatpush.msra.mxu0 0.0
    %823 = vmatpush.msra.mxu0 0.0
    %824 = vmatpush.msra.mxu0 0.0
    %825 = vmatpush.msra.mxu0 0.0
    %826 = vmatpush.msra.mxu0 0.0
    %827 = vmatpush.msra.mxu0 0.0
    %828 = vmatpush.msra.mxu0 0.0
    %829 = vmatpush.msra.mxu0 0.0
    %830 = vmatpush.msra.mxu0 0.0
    %831 = vmatpush.msra.mxu0 0.0
    %832 = vmatpush.msra.mxu0 0.0
    %833 = vmatpush.msra.mxu0 %v715
    %834 = vmatpush.msra.mxu0 %v713
    %835 = vmatmul.f32.gmra.mxu0 %v717
    %v836 = vpop.f32.mrf.mxu0
    %v837 = vadd.f32 %v817, %v836
    %838 = vdwg.mxu0
    %839 = vst [vmem:[%s7] sm:$0xff] %v777
    %840 = vst [vmem:[%s7 + $0x8] sm:$0xff] %v837
    %v841 = vadd.f32 %v777, %v837
    %842 = vadd.xlane.f32.xlu0 %v841
    %v843 = vpop.xlane.xlu0 %842
    %v844 = vadd.f32 %v843, 0.0
    %v845 = vmul.f32 %v777, %v777
    %v846 = vmul.f32 %v837, %v837
    %v847 = vadd.f32 %v845, %v846
    %848 = vadd.xlane.f32.xlu0 %v847
    %v849 = vpop.xlane.xlu0 %848
    %v850 = vadd.f32 %v849, 0.0
    %v851 = vld [vmem:[%s0 + $0x10] sm:$0xff]
    %v852 = vld [vmem:[%s0 + $0x18] sm:$0xff]
    %853 = vst [vmem:[#allocation2 + $0x200] sm:$0xff] %v851
    %854 = vst [vmem:[#allocation2 + $0x208] sm:$0xff] %v852
    %855 = vst [vmem:[#allocation3] sm:$0xff] %v415
    %856 = vst [vmem:[#allocation3 + $0x8] sm:$0xff] %v435
    %v857 = vld [vmem:[#allocation3] sm:$0xff]
    %v858 = vld [vmem:[#allocation3 + $0x8] sm:$0xff]
    %v859 = vld [vmem:[#allocation3 + $0x10] sm:$0xff]
    %v860 = vld [vmem:[#allocation2] sm:$0xff]
    %v861 = vld [vmem:[#allocation2 + $0x8] sm:$0xff]
    %v862 = vld [vmem:[#allocation2 + $0x10] sm:$0xff]
    %v863 = vld [vmem:[#allocation2 + $0x18] sm:$0xff]
    %v864 = vld [vmem:[#allocation2 + $0x20] sm:$0xff]
    %v865 = vld [vmem:[#allocation2 + $0x28] sm:$0xff]
    %v866 = vld [vmem:[#allocation2 + $0x30] sm:$0xff]
    %v867 = vld [vmem:[#allocation2 + $0x38] sm:$0xff]
    %v868 = vld [vmem:[#allocation2 + $0x40] sm:$0xff]
    %v869 = vld [vmem:[#allocation2 + $0x48] sm:$0xff]
    %v870 = vld [vmem:[#allocation2 + $0x50] sm:$0xff]
    %v871 = vld [vmem:[#allocation2 + $0x58] sm:$0xff]
    %v872 = vld [vmem:[#allocation2 + $0x60] sm:$0xff]
    %v873 = vld [vmem:[#allocation2 + $0x68] sm:$0xff]
    %v874 = vld [vmem:[#allocation2 + $0x70] sm:$0xff]
    %v875 = vld [vmem:[#allocation2 + $0x78] sm:$0xff]
    %v876 = vld [vmem:[#allocation2 + $0x80] sm:$0xff]
    %v877 = vld [vmem:[#allocation2 + $0x88] sm:$0xff]
    %v878 = vld [vmem:[#allocation2 + $0x90] sm:$0xff]
    %v879 = vld [vmem:[#allocation2 + $0x98] sm:$0xff]
    %v880 = vld [vmem:[#allocation2 + $0xa0] sm:$0xff]
    %v881 = vld [vmem:[#allocation2 + $0xa8] sm:$0xff]
    %v882 = vld [vmem:[#allocation2 + $0xb0] sm:$0xff]
    %v883 = vld [vmem:[#allocation2 + $0xb8] sm:$0xff]
    %v884 = vld [vmem:[#allocation2 + $0xc0] sm:$0xff]
    %v885 = vld [vmem:[#allocation2 + $0xc8] sm:$0xff]
    %v886 = vld [vmem:[#allocation2 + $0xd0] sm:$0xff]
    %v887 = vld [vmem:[#allocation2 + $0xd8] sm:$0xff]
    %v888 = vld [vmem:[#allocation2 + $0xe0] sm:$0xff]
    %v889 = vld [vmem:[#allocation2 + $0xe8] sm:$0xff]
    %v890 = vld [vmem:[#allocation2 + $0xf0] sm:$0xff]
    %v891 = vld [vmem:[#allocation2 + $0xf8] sm:$0xff]
    %v892 = vld [vmem:[#allocation2 + $0x100] sm:$0xff]
    %v893 = vld [vmem:[#allocation2 + $0x108] sm:$0xff]
    %v894 = vld [vmem:[#allocation2 + $0x110] sm:$0xff]
    %v895 = vld [vmem:[#allocation2 + $0x118] sm:$0xff]
    %v896 = vld [vmem:[#allocation2 + $0x120] sm:$0xff]
    %v897 = vld [vmem:[#allocation2 + $0x128] sm:$0xff]
    %v898 = vld [vmem:[#allocation2 + $0x130] sm:$0xff]
    %v899 = vld [vmem:[#allocation2 + $0x138] sm:$0xff]
    %v900 = vld [vmem:[#allocation2 + $0x140] sm:$0xff]
    %v901 = vld [vmem:[#allocation2 + $0x148] sm:$0xff]
    %v902 = vld [vmem:[#allocation2 + $0x150] sm:$0xff]
    %v903 = vld [vmem:[#allocation2 + $0x158] sm:$0xff]
    %v904 = vld [vmem:[#allocation2 + $0x160] sm:$0xff]
    %v905 = vld [vmem:[#allocation2 + $0x168] sm:$0xff]
    %v906 = vld [vmem:[#allocation2 + $0x170] sm:$0xff]
    %v907 = vld [vmem:[#allocation2 + $0x178] sm:$0xff]
    %v908 = vld [vmem:[#allocation2 + $0x180] sm:$0xff]
    %v909 = vld [vmem:[#allocation2 + $0x188] sm:$0xff]
    %v910 = vld [vmem:[#allocation2 + $0x190] sm:$0xff]
    %v911 = vld [vmem:[#allocation2 + $0x198] sm:$0xff]
    %v912 = vld [vmem:[#allocation2 + $0x1a0] sm:$0xff]
    %v913 = vld [vmem:[#allocation2 + $0x1a8] sm:$0xff]
    %v914 = vld [vmem:[#allocation2 + $0x1b0] sm:$0xff]
    %v915 = vld [vmem:[#allocation2 + $0x1b8] sm:$0xff]
    %v916 = vld [vmem:[#allocation2 + $0x1c0] sm:$0xff]
    %v917 = vld [vmem:[#allocation2 + $0x1c8] sm:$0xff]
    %v918 = vld [vmem:[#allocation2 + $0x1d0] sm:$0xff]
    %v919 = vld [vmem:[#allocation2 + $0x1d8] sm:$0xff]
    %v920 = vld [vmem:[#allocation2 + $0x1e0] sm:$0xff]
    %v921 = vld [vmem:[#allocation2 + $0x1e8] sm:$0xff]
    %v922 = vld [vmem:[#allocation2 + $0x1f0] sm:$0xff]
    %v923 = vld [vmem:[#allocation2 + $0x1f8] sm:$0xff]
    %v924 = vld [vmem:[#allocation2 + $0x200] sm:$0xff]
    %v925 = vld [vmem:[#allocation2 + $0x208] sm:$0xff]
    %v926 = vld [vmem:[#allocation2 + $0x210] sm:$0xff]
    %v927 = vld [vmem:[#allocation2 + $0x218] sm:$0xff]
    %v929 = vsel %vm635, %v859, 0
    %931 = vmatpush.msra.mxu0 %v890
    %932 = vmatpush.msra.mxu0 %v888
    %933 = vmatpush.msra.mxu0 %v886
    %934 = vmatpush.msra.mxu0 %v884
    %935 = vmatpush.msra.mxu0 %v882
    %936 = vmatpush.msra.mxu0 %v880
    %937 = vmatpush.msra.mxu0 %v878
    %938 = vmatpush.msra.mxu0 %v876
    %939 = vmatpush.msra.mxu0 %v874
    %940 = vmatpush.msra.mxu0 %v872
    %941 = vmatpush.msra.mxu0 %v870
    %942 = vmatpush.msra.mxu0 %v868
    %943 = vmatpush.msra.mxu0 %v866
    %944 = vmatpush.msra.mxu0 %v864
    %945 = vmatpush.msra.mxu0 %v862
    %946 = vmatpush.msra.mxu0 %v860
    %947 = vmatmul.f32.gmra.mxu0 %v857
    %v948 = vpop.f32.mrf.mxu0
    %v949 = vadd.f32 0.0, %v948
    %950 = vdwg.mxu0
    %951 = vmatpush.msra.mxu0 %v922
    %952 = vmatpush.msra.mxu0 %v920
    %953 = vmatpush.msra.mxu0 %v918
    %954 = vmatpush.msra.mxu0 %v916
    %955 = vmatpush.msra.mxu0 %v914
    %956 = vmatpush.msra.mxu0 %v912
    %957 = vmatpush.msra.mxu0 %v910
    %958 = vmatpush.msra.mxu0 %v908
    %959 = vmatpush.msra.mxu0 %v906
    %960 = vmatpush.msra.mxu0 %v904
    %961 = vmatpush.msra.mxu0 %v902
    %962 = vmatpush.msra.mxu0 %v900
    %963 = vmatpush.msra.mxu0 %v898
    %964 = vmatpush.msra.mxu0 %v896
    %965 = vmatpush.msra.mxu0 %v894
    %966 = vmatpush.msra.mxu0 %v892
    %967 = vmatmul.f32.gmra.mxu0 %v858
    %v968 = vpop.f32.mrf.mxu0
    %v969 = vadd.f32 %v949, %v968
    %970 = vdwg.mxu0
    %971 = vmatpush.msra.mxu0 0.0
    %972 = vmatpush.msra.mxu0 0.0
    %973 = vmatpush.msra.mxu0 0.0
    %974 = vmatpush.msra.mxu0 0.0
    %975 = vmatpush.msra.mxu0 0.0
    %976 = vmatpush.msra.mxu0 0.0
    %977 = vmatpush.msra.mxu0 0.0
    %978 = vmatpush.msra.mxu0 0.0
    %979 = vmatpush.msra.mxu0 0.0
    %980 = vmatpush.msra.mxu0 0.0
    %981 = vmatpush.msra.mxu0 0.0
    %982 = vmatpush.msra.mxu0 0.0
    %983 = vmatpush.msra.mxu0 0.0
    %984 = vmatpush.msra.mxu0 0.0
    %985 = vmatpush.msra.mxu0 %v926
    %986 = vmatpush.msra.mxu0 %v924
    %987 = vmatmul.f32.gmra.mxu0 %v929
    %v988 = vpop.f32.mrf.mxu0
    %v989 = vadd.f32 %v969, %v988
    %990 = vdwg.mxu0
    %991 = vmatpush.msra.mxu0 %v891
    %992 = vmatpush.msra.mxu0 %v889
    %993 = vmatpush.msra.mxu0 %v887
    %994 = vmatpush.msra.mxu0 %v885
    %995 = vmatpush.msra.mxu0 %v883
    %996 = vmatpush.msra.mxu0 %v881
    %997 = vmatpush.msra.mxu0 %v879
    %998 = vmatpush.msra.mxu0 %v877
    %999 = vmatpush.msra.mxu0 %v875
    %1000 = vmatpush.msra.mxu0 %v873
    %1001 = vmatpush.msra.mxu0 %v871
    %1002 = vmatpush.msra.mxu0 %v869
    %1003 = vmatpush.msra.mxu0 %v867
    %1004 = vmatpush.msra.mxu0 %v865
    %1005 = vmatpush.msra.mxu0 %v863
    %1006 = vmatpush.msra.mxu0 %v861
    %1007 = vmatmul.f32.gmra.mxu0 %v857
    %v1008 = vpop.f32.mrf.mxu0
    %v1009 = vadd.f32 0.0, %v1008
    %1010 = vdwg.mxu0
    %1011 = vmatpush.msra.mxu0 %v923
    %1012 = vmatpush.msra.mxu0 %v921
    %1013 = vmatpush.msra.mxu0 %v919
    %1014 = vmatpush.msra.mxu0 %v917
    %1015 = vmatpush.msra.mxu0 %v915
    %1016 = vmatpush.msra.mxu0 %v913
    %1017 = vmatpush.msra.mxu0 %v911
    %1018 = vmatpush.msra.mxu0 %v909
    %1019 = vmatpush.msra.mxu0 %v907
    %1020 = vmatpush.msra.mxu0 %v905
    %1021 = vmatpush.msra.mxu0 %v903
    %1022 = vmatpush.msra.mxu0 %v901
    %1023 = vmatpush.msra.mxu0 %v899
    %1024 = vmatpush.msra.mxu0 %v897
    %1025 = vmatpush.msra.mxu0 %v895
    %1026 = vmatpush.msra.mxu0 %v893
    %1027 = vmatmul.f32.gmra.mxu0 %v858
    %v1028 = vpop.f32.mrf.mxu0
    %v1029 = vadd.f32 %v1009, %v1028
    %1030 = vdwg.mxu0
    %1031 = vmatpush.msra.mxu0 0.0
    %1032 = vmatpush.msra.mxu0 0.0
    %1033 = vmatpush.msra.mxu0 0.0
    %1034 = vmatpush.msra.mxu0 0.0
    %1035 = vmatpush.msra.mxu0 0.0
    %1036 = vmatpush.msra.mxu0 0.0
    %1037 = vmatpush.msra.mxu0 0.0
    %1038 = vmatpush.msra.mxu0 0.0
    %1039 = vmatpush.msra.mxu0 0.0
    %1040 = vmatpush.msra.mxu0 0.0
    %1041 = vmatpush.msra.mxu0 0.0
    %1042 = vmatpush.msra.mxu0 0.0
    %1043 = vmatpush.msra.mxu0 0.0
    %1044 = vmatpush.msra.mxu0 0.0
    %1045 = vmatpush.msra.mxu0 %v927
    %1046 = vmatpush.msra.mxu0 %v925
    %1047 = vmatmul.f32.gmra.mxu0 %v929
    %v1048 = vpop.f32.mrf.mxu0
    %v1049 = vadd.f32 %v1029, %v1048
    %1050 = vdwg.mxu0
    %s1051 = scalar_lea.vmem %s7, 16
    %1052 = vst [vmem:[%s1051] sm:$0xff] %v989
    %1053 = vst [vmem:[%s1051 + $0x8] sm:$0xff] %v1049
    %v1054 = vadd.f32 %v989, %v1049
    %1055 = vadd.xlane.f32.xlu0 %v1054
    %v1056 = vpop.xlane.xlu0 %1055
    %v1057 = vadd.f32 %v844, %v1056
    %v1058 = vmul.f32 %v989, %v989
    %v1059 = vmul.f32 %v1049, %v1049
    %v1060 = vadd.f32 %v1058, %v1059
    %1061 = vadd.xlane.f32.xlu0 %v1060
    %v1062 = vpop.xlane.xlu0 %1061
    %v1063 = vadd.f32 %v850, %v1062
    %v1064 = vrcp.pop 432.0
    %v1065 = vmul.f32 432.0, %v1064
    %v1066 = vsub.f32 1.0, %v1065
    %v1067 = vmul.f32 %v1064, %v1066
    %v1068 = vadd.f32 %v1064, %v1067
    %vm1069 = vweird.f32 %v1064
    %v1070 = vsel %vm1069, %v1064, %v1068
    %v1071 = vmul.f32 %v1057, %v1070
    %v1072 = vmul.f32 %v1063, %v1070
    %v1073 = vmul.f32 %v1071, %v1071
    %v1074 = vsub.f32 %v1072, %v1073
    %v1075 = vmax.f32 %v1074, 0.0
    %v1076 = vadd.f32 %v1075, 1e-05
    %v1077 = vrsqrt.pop %v1076
    %v1078 = vmul.f32 %v1077, %v1076
    %v1079 = vmul.f32 %v1078, %v1077
    %v1080 = vmul.f32 0.5, %v1079
    %v1081 = vsub.f32 1.5, %v1080
    %v1082 = vmul.f32 %v1077, %v1081
    %vm1083 = vweird.f32 %v1076
    %vm1084 = vweird.f32 %v1077
    %vm1085 = vmor %vm1083, %vm1084
    %v1086 = vsel %vm1085, %v1077, %v1082
    %v1087 = vld [vmem:[%s7] sm:$0xff]
    %v1088 = vld [vmem:[%s7 + $0x8] sm:$0xff]
    %v1089 = vsub.f32 %v1087, %v1071
    %v1090 = vsub.f32 %v1088, %v1071
    %v1091 = vmul.f32 %v1089, %v1086
    %v1092 = vmul.f32 %v1090, %v1086
    %v1093 = vmax.f32 %v1091, 0.0
    %v1094 = vmax.f32 %v1092, 0.0
    %1095 = vst [vmem:[%s7] sm:$0xff] %v1093
    %1096 = vst [vmem:[%s7 + $0x8] sm:$0xff] %v1094
    %v1097 = vld [vmem:[%s1051] sm:$0xff]
    %v1098 = vld [vmem:[%s1051 + $0x8] sm:$0xff]
    %v1099 = vsub.f32 %v1097, %v1071
    %v1100 = vsub.f32 %v1098, %v1071
    %v1101 = vmul.f32 %v1099, %v1086
    %v1102 = vmul.f32 %v1100, %v1086
    %v1103 = vmax.f32 %v1101, 0.0
    %v1104 = vmax.f32 %v1102, 0.0
    %1105 = vst [vmem:[%s1051] sm:$0xff] %v1103
    %1106 = vst [vmem:[%s1051 + $0x8] sm:$0xff] %v1104
    // Predicated region
    $region34: #{pyramid_pooling_forward.1} parent=1 // pred_check
      _
    $region35: #{pyramid_pooling_forward.1} parent=1 // pred_check_branch
      %1108 = sbr.rel (0) target = $region37
    $region36: #{pyramid_pooling_forward.1} parent=1 // pred_region
      _
    $region37: #{pyramid_pooling_forward.1} parent=1 // pred_fallthru
      _
    // Predicated region
    $region38: #{pyramid_pooling_forward.1} parent=1 // pred_check
      _
    $region39: #{pyramid_pooling_forward.1} parent=1 // pred_check_branch
      %1110 = sbr.rel (0) target = $region41
    $region40: #{pyramid_pooling_forward.1} parent=1 // pred_region
      _
    $region41: #{pyramid_pooling_forward.1} parent=1 // pred_fallthru
      _
    %1111 = vsyncpa [#allocation5], 1

</llo_original>
